<compile_context>
chip_gen: v7x
topology: tpu7x:2x2x1
jax: 0.10.0
libtpu: 0.0.40
codegen_flags: <defaults>
</compile_context>

<pallas_src>
from functools import partial

import jax
import jax.numpy as jnp
from jax.experimental import pallas as pl
from jax.experimental.pallas import tpu as pltpu

EPS = 1e-5
CP = 128  # padded channel width (one full lane group)


def _make_osa_kernel(H, W, WP, Cinter):
    """Kernel closure for one image: H, W spatial, WP = sublane-padded W+2, Cinter real channels."""
    HW = H * W

    def kernel(x_ref, s1_ref, b1_ref, w1_ref, b2_ref, w2_ref, o_ref, mid_ref, cols_ref):
        # x_ref   : (HW, Cin)          one image's flattened NHWC input, f32
        # s1/b1   : (1, Cin)           folded BN1 scale / bias, f32
        # w1_ref  : (Cin, CP)   bf16   1x1 conv weight, BN2 scale folded, channels replicated 3x in lanes
        # b2_ref  : (1, CP)     f32    folded BN2 bias, replicated the same way (zero in padding lanes)
        # w2_ref  : (3*CP, CP)  bf16   3x3 conv weight as packed im2col matrix (row = dy*CP + dx*Cinter + c)
        # o_ref   : (HW, CP)    bf16   lane-dense output slab (real channels in cols [0, Cout))
        # mid_ref : (H+2, WP, CP) bf16 zero-haloed intermediate (VMEM scratch, per image)
        # cols_ref: (HW, 3*CP)  bf16   packed im2col buffer (VMEM scratch)

        # ---- Stage 1: BN1 + ReLU, then 1x1 conv (BN2 scale pre-folded; output channels are
        #      replicated 3x along lanes so the dx-packed slots fall out of the matmul for free) ----
        x = x_ref[...]                                               # (HW, Cin) f32
        t = jnp.maximum(x * s1_ref[...] + b1_ref[...], 0.0)
        y = jnp.dot(t.astype(jnp.bfloat16), w1_ref[...],
                    preferred_element_type=jnp.float32)              # (HW, CP) f32 accumulation

        # ---- Stage 2: BN2 bias + ReLU into the bf16 halo scratch ----
        z = jnp.maximum(y + b2_ref[...], 0.0).reshape(H, W, CP)      # f32
        zero_col = jnp.zeros((H, 1, CP), jnp.float32)
        z_slab = jnp.concatenate([zero_col, z, zero_col], axis=1)    # (H, W+2, CP): left/right halo folded in
        mid_ref[0:1, :, :] = jnp.zeros((1, WP, CP), jnp.bfloat16)        # top halo row (aligned)
        mid_ref[H + 1:H + 2, :, :] = jnp.zeros((1, WP, CP), jnp.bfloat16)  # bottom halo row (aligned)
        mid_ref[1:H + 1, 0:W + 2, :] = z_slab.astype(jnp.bfloat16)       # sublane-0 aligned store
        # Columns [W+2, WP) of interior rows are never read, so they are left untouched.

        # ---- Stage 3: packed im2col (K = 3*CP) and ONE MXU matmul ----
        lane = jax.lax.broadcasted_iota(jnp.int32, (1, 1, CP), 2)
        for dy in range(3):                                          # statically unrolled
            # One aligned load per dy band; dx shifts happen on the value (f32 registers).
            band = mid_ref[dy:dy + H, :, :].astype(jnp.float32)      # (H, WP, CP)
            t0 = band[:, 0:W, :]                                     # dx = 0
            t1 = band[:, 1:W + 1, :]                                 # dx = 1
            t2 = band[:, 2:W + 2, :]                                 # dx = 2
            # lanes [0,C): tap dx=0, [C,2C): dx=1, [2C,3C): dx=2; lanes >= 3C are zero in mid.
            slot = jnp.where(lane < Cinter, t0,
                             jnp.where(lane < 2 * Cinter, t1, t2))
            cols_ref[:, dy * CP:(dy + 1) * CP] = slot.astype(jnp.bfloat16).reshape(HW, CP)

        acc = jnp.dot(cols_ref[...], w2_ref[...], preferred_element_type=jnp.float32)
        o_ref[...] = acc.astype(o_ref.dtype)                         # lane-dense bf16 stores

    return kernel


def pack_osa_params(params):
    """Fold BN (inference) and pre-pack / lane-pad the conv weights. Call ONCE, reuse across calls."""
    gamma1, beta1, mean1, var1, w1, gamma2, beta2, mean2, var2, w2 = params
    Cinter, Cin = w1.shape[0], w1.shape[1]      # conv1 weight: (Cinter, Cin, 1, 1)
    Cout = w2.shape[0]                           # conv2 weight: (Cout, Cinter, 3, 3)
    assert 3 * Cinter <= CP, "3-taps-per-slot packing assumes 3*inter_planes <= 128"
    # TODO(synk): for 3*inter_planes > 128, fall back to one-tap-per-slot (K = 9*CP) packing.

    s1 = gamma1 / jnp.sqrt(var1 + EPS)
    b1 = beta1 - mean1 * s1
    s2 = gamma2 / jnp.sqrt(var2 + EPS)
    b2 = beta2 - mean2 * s2

    w1m = jnp.transpose(w1[:, :, 0, 0], (1, 0)) * s2[None, :]        # (Cin, Cinter), BN2 scale folded
    w1p = jnp.zeros((Cin, CP), jnp.float32)
    b2p = jnp.zeros((1, CP), jnp.float32)
    for r in range(3):                                               # replicate channels 3x along lanes
        w1p = w1p.at[:, r * Cinter:(r + 1) * Cinter].set(w1m)
        b2p = b2p.at[0, r * Cinter:(r + 1) * Cinter].set(b2)
    w1p = w1p.astype(jnp.bfloat16)

    # 3x3 weight as a packed im2col matrix: row = dy*CP + dx*Cinter + c, col = co.
    w2t = jnp.transpose(w2, (2, 3, 1, 0)).reshape(3, 3 * Cinter, Cout)   # [dy, dx*Cinter+c, co]
    w2p = jnp.zeros((3, CP, CP), jnp.float32).at[:, :3 * Cinter, :Cout].set(w2t)
    w2p = w2p.reshape(3 * CP, CP).astype(jnp.bfloat16)

    s1r = s1.reshape(1, Cin).astype(jnp.float32)
    b1r = b1.reshape(1, Cin).astype(jnp.float32)
    return (s1r, b1r, w1p, b2p, w2p)


@partial(jax.jit, static_argnames=("cout", "cinter"))
def osa_forward_nhwc(x_nhwc, packed, *, cout, cinter):
    """x_nhwc: (N, H, W, Cin) f32 -> (N, H, W, Cout) f32. Keeps activations NHWC (no transposes)."""
    s1r, b1r, w1p, b2p, w2p = packed
    N, H, W, Cin = x_nhwc.shape
    assert (H * W) % 8 == 0, "per-image pixel count must be a multiple of 8"
    HW = H * W
    WP = ((W + 2 + 7) // 8) * 8                                      # sublane-aligned padded width

    x = x_nhwc.reshape(N * HW, Cin)
    kernel = _make_osa_kernel(H, W, WP, cinter)

    out_flat = pl.pallas_call(
        kernel,
        out_shape=jax.ShapeDtypeStruct((N * HW, CP), jnp.bfloat16),
        grid_spec=pltpu.PrefetchScalarGridSpec(
            num_scalar_prefetch=0,
            grid=(N,),                                               # one image per grid step
            in_specs=[
                pl.BlockSpec((HW, Cin), lambda i: (i, 0)),
                pl.BlockSpec((1, Cin), lambda i: (0, 0)),
                pl.BlockSpec((1, Cin), lambda i: (0, 0)),
                pl.BlockSpec((Cin, CP), lambda i: (0, 0)),
                pl.BlockSpec((1, CP), lambda i: (0, 0)),
                pl.BlockSpec((3 * CP, CP), lambda i: (0, 0)),
            ],
            out_specs=pl.BlockSpec((HW, CP), lambda i: (i, 0)),
            scratch_shapes=[
                pltpu.VMEM((H + 2, WP, CP), jnp.bfloat16),           # padded halo intermediate
                pltpu.VMEM((HW, 3 * CP), jnp.bfloat16),              # packed im2col buffer
            ],
        ),
        compiler_params=pltpu.CompilerParams(
            dimension_semantics=("parallel",)),                      # images split across TCs on v7x
    )(x, s1r, b1r, w1p, b2p, w2p)

    return out_flat[:, :cout].astype(jnp.float32).reshape(N, H, W, cout)


def osa_forward_nchw(x_nchw, packed, *, cout, cinter):
    """NCHW wrapper for parity with the PyTorch module (adds the layout round-trip)."""
    x_nhwc = jnp.transpose(x_nchw, (0, 2, 3, 1))
    out = osa_forward_nhwc(x_nhwc, packed, cout=cout, cinter=cinter)
    return jnp.transpose(out, (0, 3, 1, 2))


def ref_forward(x, params):
    """Pure-JAX reference (XLA convs, full f32) for correctness check."""
    gamma1, beta1, mean1, var1, w1, gamma2, beta2, mean2, var2, w2 = params

    def bn(v, g, b, m, var):
        g, b, m, var = (a[None, :, None, None] for a in (g, b, m, var))
        return (v - m) / jnp.sqrt(var + EPS) * g + b

    t = jax.nn.relu(bn(x, gamma1, beta1, mean1, var1))
    y = jax.lax.conv_general_dilated(t, w1, (1, 1), 'VALID',
                                     dimension_numbers=('NCHW', 'OIHW', 'NCHW'))
    z = jax.nn.relu(bn(y, gamma2, beta2, mean2, var2))
    out = jax.lax.conv_general_dilated(z, w2, (1, 1), ((1, 1), (1, 1)),
                                       dimension_numbers=('NCHW', 'OIHW', 'NCHW'))
    return out


if __name__ == "__main__":
    # Small shapes consistent with the module: in_planes=4, out_planes=8 -> inter_planes=32.
    N, Cin, H, W = 2, 4, 16, 16
    Cout = 8
    Cinter = Cout * 4

    key = jax.random.PRNGKey(0)
    ks = jax.random.split(key, 11)

    params = (
        jax.random.normal(ks[0], (Cin,), jnp.float32) * 0.1 + 1.0,          # gamma1
        jax.random.normal(ks[1], (Cin,), jnp.float32) * 0.1,                # beta1
        jax.random.normal(ks[2], (Cin,), jnp.float32) * 0.1,                # running_mean1
        jax.random.uniform(ks[3], (Cin,), jnp.float32, 0.5, 1.5),           # running_var1
        jax.random.normal(ks[4], (Cinter, Cin, 1, 1), jnp.float32) * 0.2,   # conv1 weight
        jax.random.normal(ks[5], (Cinter,), jnp.float32) * 0.1 + 1.0,       # gamma2
        jax.random.normal(ks[6], (Cinter,), jnp.float32) * 0.1,             # beta2
        jax.random.normal(ks[7], (Cinter,), jnp.float32) * 0.1,             # running_mean2
        jax.random.uniform(ks[8], (Cinter,), jnp.float32, 0.5, 1.5),        # running_var2
        jax.random.normal(ks[9], (Cout, Cinter, 3, 3), jnp.float32) * 0.1,  # conv2 weight
    )

    x = jax.random.normal(ks[10], (N, Cin, H, W), jnp.float32)

    packed = pack_osa_params(params)                     # host-side packing hoisted: done once
    out = jax.block_until_ready(osa_forward_nchw(x, packed, cout=Cout, cinter=Cinter))
    ref = jax.block_until_ready(ref_forward(x, params))

    assert out.shape == (N, Cout, H, W), out.shape
    # bf16 MXU operands + bf16 intermediate/output slabs, f32 accumulation -> loose tolerance.
    assert jnp.allclose(out, ref, rtol=5e-2, atol=5e-2), float(jnp.max(jnp.abs(out - ref)))
    print("KERNEL_OK")
</pallas_src>

<mosaic_0001>
module attributes {stable_mosaic.version = 11 : i64} {
  func.func @kernel(%arg0: i32, %arg1: memref<256x4xf32, #tpu.memory_space<vmem>>, %arg2: memref<1x4xf32, #tpu.memory_space<vmem>>, %arg3: memref<1x4xf32, #tpu.memory_space<vmem>>, %arg4: memref<4x128xbf16, #tpu.memory_space<vmem>>, %arg5: memref<1x128xf32, #tpu.memory_space<vmem>>, %arg6: memref<384x128xbf16, #tpu.memory_space<vmem>>, %arg7: memref<256x128xbf16, #tpu.memory_space<vmem>>, %arg8: memref<18x24x128xbf16, #tpu.memory_space<vmem>>, %arg9: memref<256x384xbf16, #tpu.memory_space<vmem>>) attributes {dimension_semantics = [#tpu.dimension_semantics<parallel>], iteration_bounds = array<i64: 2>, scalar_prefetch = 0 : i64, scratch_operands = 2 : i64, tpu.core_type = #tpu.core_type<tc>, window_params = [{transform_indices = @transform_0, window_bounds = array<i64: 256, 4>}, {pipeline_mode = #tpu.pipeline_mode<synchronous>, transform_indices = @transform_1, window_bounds = array<i64: 1, 4>}, {pipeline_mode = #tpu.pipeline_mode<synchronous>, transform_indices = @transform_2, window_bounds = array<i64: 1, 4>}, {pipeline_mode = #tpu.pipeline_mode<synchronous>, transform_indices = @transform_3, window_bounds = array<i64: 4, 128>}, {pipeline_mode = #tpu.pipeline_mode<synchronous>, transform_indices = @transform_4, window_bounds = array<i64: 1, 128>}, {pipeline_mode = #tpu.pipeline_mode<synchronous>, transform_indices = @transform_5, window_bounds = array<i64: 384, 128>}, {transform_indices = @transform_6, window_bounds = array<i64: 256, 128>}]} {
    %c0 = arith.constant 0 : index
    %c0_0 = arith.constant 0 : index
    %0 = vector.load %arg1[%c0, %c0_0] : memref<256x4xf32, #tpu.memory_space<vmem>>, vector<256x4xf32>
    %c0_1 = arith.constant 0 : index
    %c0_2 = arith.constant 0 : index
    %1 = vector.load %arg2[%c0_1, %c0_2] : memref<1x4xf32, #tpu.memory_space<vmem>>, vector<1x4xf32>
    %2 = vector.broadcast %1 : vector<1x4xf32> to vector<256x4xf32>
    %3 = arith.mulf %0, %2 : vector<256x4xf32>
    %c0_3 = arith.constant 0 : index
    %c0_4 = arith.constant 0 : index
    %4 = vector.load %arg3[%c0_3, %c0_4] : memref<1x4xf32, #tpu.memory_space<vmem>>, vector<1x4xf32>
    %5 = vector.broadcast %4 : vector<1x4xf32> to vector<256x4xf32>
    %6 = arith.addf %3, %5 : vector<256x4xf32>
    %cst = arith.constant 0.000000e+00 : f32
    %7 = vector.broadcast %cst : f32 to vector<256x4xf32>
    %8 = arith.maximumf %6, %7 : vector<256x4xf32>
    %9 = arith.truncf %8 : vector<256x4xf32> to vector<256x4xbf16>
    %c0_5 = arith.constant 0 : index
    %c0_6 = arith.constant 0 : index
    %10 = vector.load %arg4[%c0_5, %c0_6] : memref<4x128xbf16, #tpu.memory_space<vmem>>, vector<4x128xbf16>
    %cst_7 = arith.constant dense<0.000000e+00> : vector<256x128xf32>
    %11 = tpu.matmul %9, %10, %cst_7 {dimension_numbers = #tpu.dot_dimension_numbers<[1], [0], [0], [1], [0, 0, 1, 1], [], []>} : vector<256x4xbf16>, vector<4x128xbf16>, vector<256x128xf32> -> vector<256x128xf32>
    %c0_8 = arith.constant 0 : index
    %c0_9 = arith.constant 0 : index
    %12 = vector.load %arg5[%c0_8, %c0_9] : memref<1x128xf32, #tpu.memory_space<vmem>>, vector<1x128xf32>
    %13 = vector.broadcast %12 : vector<1x128xf32> to vector<256x128xf32>
    %14 = arith.addf %11, %13 : vector<256x128xf32>
    %cst_10 = arith.constant 0.000000e+00 : f32
    %15 = vector.broadcast %cst_10 : f32 to vector<256x128xf32>
    %16 = arith.maximumf %14, %15 : vector<256x128xf32>
    %17 = vector.shape_cast %16 : vector<256x128xf32> to vector<16x16x128xf32>
    %cst_11 = arith.constant 0.000000e+00 : f32
    %18 = vector.broadcast %cst_11 : f32 to vector<16x1x128xf32>
    %19 = tpu.concatenate %18, %17, %18 in 1 : vector<16x1x128xf32>, vector<16x16x128xf32>, vector<16x1x128xf32> -> vector<16x18x128xf32>
    %cst_12 = arith.constant 0.000000e+00 : bf16
    %20 = vector.broadcast %cst_12 : bf16 to vector<1x24x128xbf16>
    %c0_13 = arith.constant 0 : index
    %c0_14 = arith.constant 0 : index
    %c0_15 = arith.constant 0 : index
    %21 = vector.load %arg8[%c0_13, %c0_14, %c0_15] : memref<18x24x128xbf16, #tpu.memory_space<vmem>>, vector<1x24x128xbf16>
    tpu.vector_store %arg8[%c0_13, %c0_14, %c0_15], %20 {strides = array<i32>} : memref<18x24x128xbf16, #tpu.memory_space<vmem>>, vector<1x24x128xbf16>,
    %cst_16 = arith.constant 0.000000e+00 : bf16
    %22 = vector.broadcast %cst_16 : bf16 to vector<1x24x128xbf16>
    %c17 = arith.constant 17 : index
    %c0_17 = arith.constant 0 : index
    %c0_18 = arith.constant 0 : index
    %23 = vector.load %arg8[%c17, %c0_17, %c0_18] : memref<18x24x128xbf16, #tpu.memory_space<vmem>>, vector<1x24x128xbf16>
    tpu.vector_store %arg8[%c17, %c0_17, %c0_18], %22 {strides = array<i32>} : memref<18x24x128xbf16, #tpu.memory_space<vmem>>, vector<1x24x128xbf16>,
    %24 = arith.truncf %19 : vector<16x18x128xf32> to vector<16x18x128xbf16>
    %c1 = arith.constant 1 : index
    %c0_19 = arith.constant 0 : index
    %c0_20 = arith.constant 0 : index
    %25 = vector.load %arg8[%c1, %c0_19, %c0_20] : memref<18x24x128xbf16, #tpu.memory_space<vmem>>, vector<16x18x128xbf16>
    tpu.vector_store %arg8[%c1, %c0_19, %c0_20], %24 {strides = array<i32>} : memref<18x24x128xbf16, #tpu.memory_space<vmem>>, vector<16x18x128xbf16>,
    %26 = tpu.iota {dimensions = array<i32: 2>} : vector<1x1x128xi32>
    %c0_21 = arith.constant 0 : index
    %c0_22 = arith.constant 0 : index
    %c0_23 = arith.constant 0 : index
    %27 = vector.load %arg8[%c0_21, %c0_22, %c0_23] : memref<18x24x128xbf16, #tpu.memory_space<vmem>>, vector<16x24x128xbf16>
    %28 = arith.extf %27 : vector<16x24x128xbf16> to vector<16x24x128xf32>
    %29 = vector.extract_strided_slice %28 {offsets = [0, 0, 0], sizes = [16, 16, 128], strides = [1, 1, 1]} : vector<16x24x128xf32> to vector<16x16x128xf32>
    %30 = vector.extract_strided_slice %28 {offsets = [0, 1, 0], sizes = [16, 16, 128], strides = [1, 1, 1]} : vector<16x24x128xf32> to vector<16x16x128xf32>
    %31 = vector.extract_strided_slice %28 {offsets = [0, 2, 0], sizes = [16, 16, 128], strides = [1, 1, 1]} : vector<16x24x128xf32> to vector<16x16x128xf32>
    %c32_i32 = arith.constant 32 : i32
    %32 = vector.broadcast %c32_i32 : i32 to vector<1x1x128xi32>
    %33 = arith.cmpi slt, %26, %32 : vector<1x1x128xi32>
    %c64_i32 = arith.constant 64 : i32
    %34 = vector.broadcast %c64_i32 : i32 to vector<1x1x128xi32>
    %35 = arith.cmpi slt, %26, %34 : vector<1x1x128xi32>
    %36 = vector.shape_cast %35 : vector<1x1x128xi1> to vector<1x1x128xi1>
    %37 = vector.broadcast %36 : vector<1x1x128xi1> to vector<16x16x128xi1>
    %38 = arith.select %37, %30, %31 : vector<16x16x128xi1>, vector<16x16x128xf32>
    %39 = vector.shape_cast %33 : vector<1x1x128xi1> to vector<1x1x128xi1>
    %40 = vector.broadcast %39 : vector<1x1x128xi1> to vector<16x16x128xi1>
    %41 = arith.select %40, %29, %38 : vector<16x16x128xi1>, vector<16x16x128xf32>
    %42 = arith.truncf %41 : vector<16x16x128xf32> to vector<16x16x128xbf16>
    %43 = vector.shape_cast %42 : vector<16x16x128xbf16> to vector<256x128xbf16>
    %c0_24 = arith.constant 0 : index
    %c0_25 = arith.constant 0 : index
    %44 = vector.load %arg9[%c0_24, %c0_25] : memref<256x384xbf16, #tpu.memory_space<vmem>>, vector<256x128xbf16>
    tpu.vector_store %arg9[%c0_24, %c0_25], %43 {strides = array<i32>} : memref<256x384xbf16, #tpu.memory_space<vmem>>, vector<256x128xbf16>,
    %c1_26 = arith.constant 1 : index
    %c0_27 = arith.constant 0 : index
    %c0_28 = arith.constant 0 : index
    %45 = vector.load %arg8[%c1_26, %c0_27, %c0_28] : memref<18x24x128xbf16, #tpu.memory_space<vmem>>, vector<16x24x128xbf16>
    %46 = arith.extf %45 : vector<16x24x128xbf16> to vector<16x24x128xf32>
    %47 = vector.extract_strided_slice %46 {offsets = [0, 0, 0], sizes = [16, 16, 128], strides = [1, 1, 1]} : vector<16x24x128xf32> to vector<16x16x128xf32>
    %48 = vector.extract_strided_slice %46 {offsets = [0, 1, 0], sizes = [16, 16, 128], strides = [1, 1, 1]} : vector<16x24x128xf32> to vector<16x16x128xf32>
    %49 = vector.extract_strided_slice %46 {offsets = [0, 2, 0], sizes = [16, 16, 128], strides = [1, 1, 1]} : vector<16x24x128xf32> to vector<16x16x128xf32>
    %c32_i32_29 = arith.constant 32 : i32
    %50 = vector.broadcast %c32_i32_29 : i32 to vector<1x1x128xi32>
    %51 = arith.cmpi slt, %26, %50 : vector<1x1x128xi32>
    %c64_i32_30 = arith.constant 64 : i32
    %52 = vector.broadcast %c64_i32_30 : i32 to vector<1x1x128xi32>
    %53 = arith.cmpi slt, %26, %52 : vector<1x1x128xi32>
    %54 = vector.shape_cast %53 : vector<1x1x128xi1> to vector<1x1x128xi1>
    %55 = vector.broadcast %54 : vector<1x1x128xi1> to vector<16x16x128xi1>
    %56 = arith.select %55, %48, %49 : vector<16x16x128xi1>, vector<16x16x128xf32>
    %57 = vector.shape_cast %51 : vector<1x1x128xi1> to vector<1x1x128xi1>
    %58 = vector.broadcast %57 : vector<1x1x128xi1> to vector<16x16x128xi1>
    %59 = arith.select %58, %47, %56 : vector<16x16x128xi1>, vector<16x16x128xf32>
    %60 = arith.truncf %59 : vector<16x16x128xf32> to vector<16x16x128xbf16>
    %61 = vector.shape_cast %60 : vector<16x16x128xbf16> to vector<256x128xbf16>
    %c0_31 = arith.constant 0 : index
    %c128 = arith.constant 128 : index
    %62 = vector.load %arg9[%c0_31, %c128] : memref<256x384xbf16, #tpu.memory_space<vmem>>, vector<256x128xbf16>
    tpu.vector_store %arg9[%c0_31, %c128], %61 {strides = array<i32>} : memref<256x384xbf16, #tpu.memory_space<vmem>>, vector<256x128xbf16>,
    %c2 = arith.constant 2 : index
    %c0_32 = arith.constant 0 : index
    %c0_33 = arith.constant 0 : index
    %63 = vector.load %arg8[%c2, %c0_32, %c0_33] : memref<18x24x128xbf16, #tpu.memory_space<vmem>>, vector<16x24x128xbf16>
    %64 = arith.extf %63 : vector<16x24x128xbf16> to vector<16x24x128xf32>
    %65 = vector.extract_strided_slice %64 {offsets = [0, 0, 0], sizes = [16, 16, 128], strides = [1, 1, 1]} : vector<16x24x128xf32> to vector<16x16x128xf32>
    %66 = vector.extract_strided_slice %64 {offsets = [0, 1, 0], sizes = [16, 16, 128], strides = [1, 1, 1]} : vector<16x24x128xf32> to vector<16x16x128xf32>
    %67 = vector.extract_strided_slice %64 {offsets = [0, 2, 0], sizes = [16, 16, 128], strides = [1, 1, 1]} : vector<16x24x128xf32> to vector<16x16x128xf32>
    %c32_i32_34 = arith.constant 32 : i32
    %68 = vector.broadcast %c32_i32_34 : i32 to vector<1x1x128xi32>
    %69 = arith.cmpi slt, %26, %68 : vector<1x1x128xi32>
    %c64_i32_35 = arith.constant 64 : i32
    %70 = vector.broadcast %c64_i32_35 : i32 to vector<1x1x128xi32>
    %71 = arith.cmpi slt, %26, %70 : vector<1x1x128xi32>
    %72 = vector.shape_cast %71 : vector<1x1x128xi1> to vector<1x1x128xi1>
    %73 = vector.broadcast %72 : vector<1x1x128xi1> to vector<16x16x128xi1>
    %74 = arith.select %73, %66, %67 : vector<16x16x128xi1>, vector<16x16x128xf32>
    %75 = vector.shape_cast %69 : vector<1x1x128xi1> to vector<1x1x128xi1>
    %76 = vector.broadcast %75 : vector<1x1x128xi1> to vector<16x16x128xi1>
    %77 = arith.select %76, %65, %74 : vector<16x16x128xi1>, vector<16x16x128xf32>
    %78 = arith.truncf %77 : vector<16x16x128xf32> to vector<16x16x128xbf16>
    %79 = vector.shape_cast %78 : vector<16x16x128xbf16> to vector<256x128xbf16>
    %c0_36 = arith.constant 0 : index
    %c256 = arith.constant 256 : index
    %80 = vector.load %arg9[%c0_36, %c256] : memref<256x384xbf16, #tpu.memory_space<vmem>>, vector<256x128xbf16>
    tpu.vector_store %arg9[%c0_36, %c256], %79 {strides = array<i32>} : memref<256x384xbf16, #tpu.memory_space<vmem>>, vector<256x128xbf16>,
    %c0_37 = arith.constant 0 : index
    %c0_38 = arith.constant 0 : index
    %81 = vector.load %arg9[%c0_37, %c0_38] : memref<256x384xbf16, #tpu.memory_space<vmem>>, vector<256x384xbf16>
    %c0_39 = arith.constant 0 : index
    %c0_40 = arith.constant 0 : index
    %82 = vector.load %arg6[%c0_39, %c0_40] : memref<384x128xbf16, #tpu.memory_space<vmem>>, vector<384x128xbf16>
    %cst_41 = arith.constant dense<0.000000e+00> : vector<256x128xf32>
    %83 = tpu.matmul %81, %82, %cst_41 {dimension_numbers = #tpu.dot_dimension_numbers<[1], [0], [0], [1], [0, 0, 1, 1], [], []>} : vector<256x384xbf16>, vector<384x128xbf16>, vector<256x128xf32> -> vector<256x128xf32>
    %84 = arith.truncf %83 : vector<256x128xf32> to vector<256x128xbf16>
    %c0_42 = arith.constant 0 : index
    %c0_43 = arith.constant 0 : index
    %85 = vector.load %arg7[%c0_42, %c0_43] : memref<256x128xbf16, #tpu.memory_space<vmem>>, vector<256x128xbf16>
    tpu.vector_store %arg7[%c0_42, %c0_43], %84 {strides = array<i32>} : memref<256x128xbf16, #tpu.memory_space<vmem>>, vector<256x128xbf16>,
    return
  }
  func.func @transform_0(%arg0: i32) -> (i32, i32) {
    %c0_i32 = arith.constant 0 : i32
    %c0_i32_0 = arith.constant 0 : i32
    return %arg0, %c0_i32 : i32, i32
  }
  func.func @transform_1(%arg0: i32) -> (i32, i32) {
    %c0_i32 = arith.constant 0 : i32
    %c0_i32_0 = arith.constant 0 : i32
    %c0_i32_1 = arith.constant 0 : i32
    return %c0_i32, %c0_i32_0 : i32, i32
  }
  func.func @transform_2(%arg0: i32) -> (i32, i32) {
    %c0_i32 = arith.constant 0 : i32
    %c0_i32_0 = arith.constant 0 : i32
    %c0_i32_1 = arith.constant 0 : i32
    return %c0_i32, %c0_i32_0 : i32, i32
  }
  func.func @transform_3(%arg0: i32) -> (i32, i32) {
    %c0_i32 = arith.constant 0 : i32
    %c0_i32_0 = arith.constant 0 : i32
    %c0_i32_1 = arith.constant 0 : i32
    return %c0_i32, %c0_i32_0 : i32, i32
  }
  func.func @transform_4(%arg0: i32) -> (i32, i32) {
    %c0_i32 = arith.constant 0 : i32
    %c0_i32_0 = arith.constant 0 : i32
    %c0_i32_1 = arith.constant 0 : i32
    return %c0_i32, %c0_i32_0 : i32, i32
  }
  func.func @transform_5(%arg0: i32) -> (i32, i32) {
    %c0_i32 = arith.constant 0 : i32
    %c0_i32_0 = arith.constant 0 : i32
    %c0_i32_1 = arith.constant 0 : i32
    return %c0_i32, %c0_i32_0 : i32, i32
  }
  func.func @transform_6(%arg0: i32) -> (i32, i32) {
    %c0_i32 = arith.constant 0 : i32
    %c0_i32_0 = arith.constant 0 : i32
    return %arg0, %c0_i32 : i32, i32
  }
}

</mosaic_0001>

<llo_original>
// kernel: osa_forward_nhwc.1
$region0: #{osa_forward_nhwc.1}
  #allocation0 [shape = 'u32[]', space=smem, size = 0x4, offset = 0x4, fixed_abs, tag = 'smem constant byte address 0x4 - core index']
  #allocation1 [shape = 'u32[144,128]{1,0:T(1,128)}', space=vmem, size = 0x12000, scoped, tag = 'internal scratch']
  #allocation2 [shape = 'bf16[18,24,128]{2,1,0:T(8,128)(2,1)}', space=vmem, size = 0x1b000, scoped, tag = 'scratch operand']
  #allocation3 [shape = 'bf16[256,384]{1,0:T(16,128)(2,1)}', space=vmem, size = 0x30000, scoped, tag = 'scratch operand']
  %s0 = inlined_call_operand.vmem [shape: f32[512,4], index: 0, kind: input, shape index: {}]
  %s1 = inlined_call_operand.vmem [shape: f32[1,4], index: 1, kind: input, shape index: {}]
  %s2 = inlined_call_operand.vmem [shape: f32[1,4], index: 2, kind: input, shape index: {}]
  %s3 = inlined_call_operand.vmem [shape: bf16[4,128], index: 3, kind: input, shape index: {}]
  %s4 = inlined_call_operand.vmem [shape: f32[1,128], index: 4, kind: input, shape index: {}]
  %s5 = inlined_call_operand.vmem [shape: bf16[384,128], index: 5, kind: input, shape index: {}]
  %s6 = inlined_call_operand.vmem [shape: bf16[512,128], index: 6, kind: output, shape index: {}]
  %s7 = sld [smem:[#allocation0]]
  $region57: #{osa_forward_nhwc.1} parent=0
    _
  %s9 = ssub.s32 1, %s7
  %s10 = scalar_select 0, %s9, %s7
  loop: start=0, step=1, limit=4
  $region2: #{osa_forward_nhwc.1} parent=0 // loop_pre_header
    _
  $region3: #{osa_forward_nhwc.1} parent=0 // loop_header
    %s12 = sphi 0, %s16
    %p13 = scmp.ge.s32.totalorder %s12, 4
    %s22 = sphi 0, %s24
    %s25 = sphi 0, %s22
    %s26 = sphi 0, %s25
    %s42 = sphi 0, %s26
    %s46 = sphi 0, %s46
    %s48 = sphi 0, %s46
    %s49 = sphi 0, %s48
    %s63 = sphi 0, %s49
    %s67 = sphi 0, %s67
    %s69 = sphi 0, %s67
    %s70 = sphi 0, %s69
    %s84 = sphi 0, %s70
    %s88 = sphi 0, %s88
    %s90 = sphi 0, %s88
    %s91 = sphi 0, %s90
    %s105 = sphi 0, %s91
    %s109 = sphi 0, %s109
    %s111 = sphi 0, %s109
    %s112 = sphi 0, %s111
    %s126 = sphi 0, %s112
    %s130 = sphi 0, %s130
    %s132 = sphi 0, %s130
    %s133 = sphi 0, %s132
    %s147 = sphi 0, %s133
    %s153 = sphi 0, %s155
    %s156 = sphi 0, %s153
    %s157 = sphi 0, %s156
    %s173 = sphi 0, %s157
  $region4: #{osa_forward_nhwc.1} parent=0 // loop_header_branch
    %15 = sbr.rel (%p13) target = $region8
  $region5: #{osa_forward_nhwc.1} parent=0 // loop_body
    %s17 = ssub.s32 %s12, 1
    %s18 = ssub.s32 %s12, 2
    %s19 = sadd.s32 %s12, 1
    %s20 = ssub.s32 %s12, %s19
    %p21 = scmp.eq.s32.totalorder %s20, 0
    %s23 = sadd.s32 %s22, 1
    %s24 = scalar_select %p21, %s22, %s23
    %p27 = pneg %p21
    %p28 = scmp.eq.s32.totalorder %s12, 1
    %p29 = por %p27, %p28
    %p30 = scmp.ne.s32.totalorder %s22, %s25
    %p31 = scmp.eq.s32.totalorder %s12, 0
    %p32 = por %p30, %p31
    %p33 = scmp.ne.s32.totalorder %s22, %s25
    %p34 = scmp.eq.s32.totalorder %s17, 1
    %p35 = por %p33, %p34
    %p36 = scmp.ne.s32.totalorder %s25, %s26
    %p37 = scmp.eq.s32.totalorder %s17, 0
    %p38 = por %p36, %p37
    %p39 = scmp.ne.s32.totalorder %s25, %s26
    %p40 = scmp.eq.s32.totalorder %s18, 1
    %p41 = por %p39, %p40
    %p43 = scmp.ne.s32.totalorder %s26, %s42
    %p44 = scmp.eq.s32.totalorder %s18, 0
    %p45 = por %p43, %p44
    %s47 = sadd.s32 %s46, 1
    %p50 = scmp.eq.s32.totalorder %s12, 1
    %p51 = scmp.ne.s32.totalorder %s46, %s48
    %p52 = scmp.eq.s32.totalorder %s12, 0
    %p53 = por %p51, %p52
    %p54 = scmp.ne.s32.totalorder %s46, %s48
    %p55 = scmp.eq.s32.totalorder %s17, 1
    %p56 = por %p54, %p55
    %p57 = scmp.ne.s32.totalorder %s48, %s49
    %p58 = scmp.eq.s32.totalorder %s17, 0
    %p59 = por %p57, %p58
    %p60 = scmp.ne.s32.totalorder %s48, %s49
    %p61 = scmp.eq.s32.totalorder %s18, 1
    %p62 = por %p60, %p61
    %p64 = scmp.ne.s32.totalorder %s49, %s63
    %p65 = scmp.eq.s32.totalorder %s18, 0
    %p66 = por %p64, %p65
    %s68 = sadd.s32 %s67, 1
    %p71 = scmp.eq.s32.totalorder %s12, 1
    %p72 = scmp.ne.s32.totalorder %s67, %s69
    %p73 = scmp.eq.s32.totalorder %s12, 0
    %p74 = por %p72, %p73
    %p75 = scmp.ne.s32.totalorder %s67, %s69
    %p76 = scmp.eq.s32.totalorder %s17, 1
    %p77 = por %p75, %p76
    %p78 = scmp.ne.s32.totalorder %s69, %s70
    %p79 = scmp.eq.s32.totalorder %s17, 0
    %p80 = por %p78, %p79
    %p81 = scmp.ne.s32.totalorder %s69, %s70
    %p82 = scmp.eq.s32.totalorder %s18, 1
    %p83 = por %p81, %p82
    %p85 = scmp.ne.s32.totalorder %s70, %s84
    %p86 = scmp.eq.s32.totalorder %s18, 0
    %p87 = por %p85, %p86
    %s89 = sadd.s32 %s88, 1
    %p92 = scmp.eq.s32.totalorder %s12, 1
    %p93 = scmp.ne.s32.totalorder %s88, %s90
    %p94 = scmp.eq.s32.totalorder %s12, 0
    %p95 = por %p93, %p94
    %p96 = scmp.ne.s32.totalorder %s88, %s90
    %p97 = scmp.eq.s32.totalorder %s17, 1
    %p98 = por %p96, %p97
    %p99 = scmp.ne.s32.totalorder %s90, %s91
    %p100 = scmp.eq.s32.totalorder %s17, 0
    %p101 = por %p99, %p100
    %p102 = scmp.ne.s32.totalorder %s90, %s91
    %p103 = scmp.eq.s32.totalorder %s18, 1
    %p104 = por %p102, %p103
    %p106 = scmp.ne.s32.totalorder %s91, %s105
    %p107 = scmp.eq.s32.totalorder %s18, 0
    %p108 = por %p106, %p107
    %s110 = sadd.s32 %s109, 1
    %p113 = scmp.eq.s32.totalorder %s12, 1
    %p114 = scmp.ne.s32.totalorder %s109, %s111
    %p115 = scmp.eq.s32.totalorder %s12, 0
    %p116 = por %p114, %p115
    %p117 = scmp.ne.s32.totalorder %s109, %s111
    %p118 = scmp.eq.s32.totalorder %s17, 1
    %p119 = por %p117, %p118
    %p120 = scmp.ne.s32.totalorder %s111, %s112
    %p121 = scmp.eq.s32.totalorder %s17, 0
    %p122 = por %p120, %p121
    %p123 = scmp.ne.s32.totalorder %s111, %s112
    %p124 = scmp.eq.s32.totalorder %s18, 1
    %p125 = por %p123, %p124
    %p127 = scmp.ne.s32.totalorder %s112, %s126
    %p128 = scmp.eq.s32.totalorder %s18, 0
    %p129 = por %p127, %p128
    %s131 = sadd.s32 %s130, 1
    %p134 = scmp.eq.s32.totalorder %s12, 1
    %p135 = scmp.ne.s32.totalorder %s130, %s132
    %p136 = scmp.eq.s32.totalorder %s12, 0
    %p137 = por %p135, %p136
    %p138 = scmp.ne.s32.totalorder %s130, %s132
    %p139 = scmp.eq.s32.totalorder %s17, 1
    %p140 = por %p138, %p139
    %p141 = scmp.ne.s32.totalorder %s132, %s133
    %p142 = scmp.eq.s32.totalorder %s17, 0
    %p143 = por %p141, %p142
    %p144 = scmp.ne.s32.totalorder %s132, %s133
    %p145 = scmp.eq.s32.totalorder %s18, 1
    %p146 = por %p144, %p145
    %p148 = scmp.ne.s32.totalorder %s133, %s147
    %p149 = scmp.eq.s32.totalorder %s18, 0
    %p150 = por %p148, %p149
    %s151 = ssub.s32 %s12, %s19
    %p152 = scmp.eq.s32.totalorder %s151, 0
    %s154 = sadd.s32 %s153, 1
    %s155 = scalar_select %p152, %s153, %s154
    %p158 = pneg %p152
    %p159 = scmp.eq.s32.totalorder %s12, 1
    %p160 = por %p158, %p159
    %p161 = scmp.ne.s32.totalorder %s153, %s156
    %p162 = scmp.eq.s32.totalorder %s12, 0
    %p163 = por %p161, %p162
    %p164 = scmp.ne.s32.totalorder %s153, %s156
    %p165 = scmp.eq.s32.totalorder %s17, 1
    %p166 = por %p164, %p165
    %p167 = scmp.ne.s32.totalorder %s156, %s157
    %p168 = scmp.eq.s32.totalorder %s17, 0
    %p169 = por %p167, %p168
    %p170 = scmp.ne.s32.totalorder %s156, %s157
    %p171 = scmp.eq.s32.totalorder %s18, 1
    %p172 = por %p170, %p171
    %p174 = scmp.ne.s32.totalorder %s157, %s173
    %p175 = scmp.eq.s32.totalorder %s18, 0
    %p176 = por %p174, %p175
    %p177 = scmp.le.s32.totalorder 1, %s12
    %p178 = scmp.lt.s32.totalorder %s12, 3
    %p179 = pnand %p177, %p178
    %p180 = pneg %p179
    // Predicated region
    $region9: #{osa_forward_nhwc.1} parent=5 // pred_check
      _
    $region10: #{osa_forward_nhwc.1} parent=5 // pred_check_branch
      %182 = sbr.rel (%p179) target = $region12
    $region11: #{osa_forward_nhwc.1} parent=5 // pred_region
      %s183 = ssub.s32 %s12, 1
      // Predicated region
      $region13: #{osa_forward_nhwc.1} parent=11 // pred_check
        %p184 = pneg %p59
      $region14: #{osa_forward_nhwc.1} parent=11 // pred_check_branch
        %186 = sbr.rel (%p184) target = $region16
      $region15: #{osa_forward_nhwc.1} parent=11 // pred_region
        _
      $region16: #{osa_forward_nhwc.1} parent=11 // pred_fallthru
        _
      // Predicated region
      $region17: #{osa_forward_nhwc.1} parent=11 // pred_check
        %p187 = pneg %p80
      $region18: #{osa_forward_nhwc.1} parent=11 // pred_check_branch
        %189 = sbr.rel (%p187) target = $region20
      $region19: #{osa_forward_nhwc.1} parent=11 // pred_region
        _
      $region20: #{osa_forward_nhwc.1} parent=11 // pred_fallthru
        _
      // Predicated region
      $region21: #{osa_forward_nhwc.1} parent=11 // pred_check
        %p190 = pneg %p101
      $region22: #{osa_forward_nhwc.1} parent=11 // pred_check_branch
        %192 = sbr.rel (%p190) target = $region24
      $region23: #{osa_forward_nhwc.1} parent=11 // pred_region
        _
      $region24: #{osa_forward_nhwc.1} parent=11 // pred_fallthru
        _
      // Predicated region
      $region25: #{osa_forward_nhwc.1} parent=11 // pred_check
        %p193 = pneg %p122
      $region26: #{osa_forward_nhwc.1} parent=11 // pred_check_branch
        %195 = sbr.rel (%p193) target = $region28
      $region27: #{osa_forward_nhwc.1} parent=11 // pred_region
        _
      $region28: #{osa_forward_nhwc.1} parent=11 // pred_fallthru
        _
      // Predicated region
      $region29: #{osa_forward_nhwc.1} parent=11 // pred_check
        %p196 = pneg %p143
      $region30: #{osa_forward_nhwc.1} parent=11 // pred_check_branch
        %198 = sbr.rel (%p196) target = $region32
      $region31: #{osa_forward_nhwc.1} parent=11 // pred_region
        _
      $region32: #{osa_forward_nhwc.1} parent=11 // pred_fallthru
        _
    $region12: #{osa_forward_nhwc.1} parent=5 // pred_fallthru
      _
    %p199 = scmp.lt.s32.totalorder %s12, 2
    // Predicated region
    $region33: #{osa_forward_nhwc.1} parent=5 // pred_check
      %p200 = pneg %p199
    $region34: #{osa_forward_nhwc.1} parent=5 // pred_check_branch
      %202 = sbr.rel (%p200) target = $region36
    $region35: #{osa_forward_nhwc.1} parent=5 // pred_region
      // Predicated region
      $region37: #{osa_forward_nhwc.1} parent=35 // pred_check
        %p203 = pneg %p32
      $region38: #{osa_forward_nhwc.1} parent=35 // pred_check_branch
        %205 = sbr.rel (%p203) target = $region40
      $region39: #{osa_forward_nhwc.1} parent=35 // pred_region
        %s206 = smul.u32 32, %s12
        %p207 = scmp.lt.s32.totalorder %s206, 63
        %s208 = scalar_select %p207, %s206, 63
        %s209 = smul.addr %s208, 8
        %s210 = scalar_lea.vmem %s0, %s209
        %s211 = smul.u32 32, %s12
      $region40: #{osa_forward_nhwc.1} parent=35 // pred_fallthru
        _
    $region36: #{osa_forward_nhwc.1} parent=5 // pred_fallthru
      _
    %p212 = scmp.le.s32.totalorder 1, %s12
    %p213 = scmp.lt.s32.totalorder %s12, 3
    %p214 = pnand %p212, %p213
    %p215 = pneg %p214
    // Predicated region
    $region41: #{osa_forward_nhwc.1} parent=5 // pred_check
      _
    $region42: #{osa_forward_nhwc.1} parent=5 // pred_check_branch
      %217 = sbr.rel (%p214) target = $region44
    $region43: #{osa_forward_nhwc.1} parent=5 // pred_region
      %s218 = ssub.s32 %s12, 1
      %s219 = smul.u32 32, %s17
      %p220 = scmp.lt.s32.totalorder %s219, 63
      %s221 = scalar_select %p220, %s219, 63
      %s222 = smul.addr %s221, 8
      %s223 = scalar_lea.vmem %s0, %s222
      %p224 = pneg %p38
      %p225 = pneg %p35
      %p226 = pneg %p59
      %p227 = pneg %p56
      %p228 = pneg %p80
      %p229 = pneg %p77
      %p230 = pneg %p101
      %p231 = pneg %p98
      %p232 = pneg %p122
      %p233 = pneg %p119
      %p234 = pneg %p143
      %p235 = pneg %p140
      %p236 = pneg %p169
      %p237 = pneg %p166
      %s238 = smul.u32 32, %s17
      %p239 = scmp.lt.s32.totalorder %s238, 63
      %s240 = scalar_select %p239, %s238, 63
      %s241 = smul.addr %s240, 4
      %s242 = scalar_lea.vmem %s6, %s241
      %s243 = smul.u32 32, %s17
      %p244 = scmp.lt.s32.totalorder %s243, 63
      %s245 = scalar_select %p244, %s243, 63
      %s246 = smul.addr %s245, 8
      %s247 = scalar_lea.vmem %s0, %s246
      %s248 = smul.u32 32, %s17
      %s249 = smul.u32 32, %s17
      %p250 = scmp.lt.s32.totalorder %s249, 63
      %s251 = scalar_select %p250, %s249, 63
      %s252 = smul.addr %s251, 4
      %s253 = scalar_lea.vmem %s6, %s252
      %s254 = smul.u32 32, %s17
      %v256 = vld [vmem:[%s247] sm:$0xff]
      %v257 = vld [vmem:[%s247 + $0x8] sm:$0xff]
      %v258 = vld [vmem:[%s247 + $0x10] sm:$0xff]
      %v259 = vld [vmem:[%s247 + $0x18] sm:$0xff]
      %v260 = vld [vmem:[%s247 + $0x20] sm:$0xff]
      %v261 = vld [vmem:[%s247 + $0x28] sm:$0xff]
      %v262 = vld [vmem:[%s247 + $0x30] sm:$0xff]
      %v263 = vld [vmem:[%s247 + $0x38] sm:$0xff]
      %v264 = vld [vmem:[%s247 + $0x40] sm:$0xff]
      %v265 = vld [vmem:[%s247 + $0x48] sm:$0xff]
      %v266 = vld [vmem:[%s247 + $0x50] sm:$0xff]
      %v267 = vld [vmem:[%s247 + $0x58] sm:$0xff]
      %v268 = vld [vmem:[%s247 + $0x60] sm:$0xff]
      %v269 = vld [vmem:[%s247 + $0x68] sm:$0xff]
      %v270 = vld [vmem:[%s247 + $0x70] sm:$0xff]
      %v271 = vld [vmem:[%s247 + $0x78] sm:$0xff]
      %v272 = vld [vmem:[%s247 + $0x80] sm:$0xff]
      %v273 = vld [vmem:[%s247 + $0x88] sm:$0xff]
      %v274 = vld [vmem:[%s247 + $0x90] sm:$0xff]
      %v275 = vld [vmem:[%s247 + $0x98] sm:$0xff]
      %v276 = vld [vmem:[%s247 + $0xa0] sm:$0xff]
      %v277 = vld [vmem:[%s247 + $0xa8] sm:$0xff]
      %v278 = vld [vmem:[%s247 + $0xb0] sm:$0xff]
      %v279 = vld [vmem:[%s247 + $0xb8] sm:$0xff]
      %v280 = vld [vmem:[%s247 + $0xc0] sm:$0xff]
      %v281 = vld [vmem:[%s247 + $0xc8] sm:$0xff]
      %v282 = vld [vmem:[%s247 + $0xd0] sm:$0xff]
      %v283 = vld [vmem:[%s247 + $0xd8] sm:$0xff]
      %v284 = vld [vmem:[%s247 + $0xe0] sm:$0xff]
      %v285 = vld [vmem:[%s247 + $0xe8] sm:$0xff]
      %v286 = vld [vmem:[%s247 + $0xf0] sm:$0xff]
      %v287 = vld [vmem:[%s247 + $0xf8] sm:$0xff]
      %v288 = vld [vmem:[%s1] sm:$0x1]
      %v290 = vlaneseq
      %v291 = vshrl.u32 %v290, 7
      %v292 = vsub.s32 0, %v291
      %v293 = vrot.slane %v288, %v292
      %v295 = vmul.f32 %v256, %v293
      %v296 = vmul.f32 %v257, %v293
      %v297 = vmul.f32 %v258, %v293
      %v298 = vmul.f32 %v259, %v293
      %v299 = vmul.f32 %v260, %v293
      %v300 = vmul.f32 %v261, %v293
      %v301 = vmul.f32 %v262, %v293
      %v302 = vmul.f32 %v263, %v293
      %v303 = vmul.f32 %v264, %v293
      %v304 = vmul.f32 %v265, %v293
      %v305 = vmul.f32 %v266, %v293
      %v306 = vmul.f32 %v267, %v293
      %v307 = vmul.f32 %v268, %v293
      %v308 = vmul.f32 %v269, %v293
      %v309 = vmul.f32 %v270, %v293
      %v310 = vmul.f32 %v271, %v293
      %v311 = vmul.f32 %v272, %v293
      %v312 = vmul.f32 %v273, %v293
      %v313 = vmul.f32 %v274, %v293
      %v314 = vmul.f32 %v275, %v293
      %v315 = vmul.f32 %v276, %v293
      %v316 = vmul.f32 %v277, %v293
      %v317 = vmul.f32 %v278, %v293
      %v318 = vmul.f32 %v279, %v293
      %v319 = vmul.f32 %v280, %v293
      %v320 = vmul.f32 %v281, %v293
      %v321 = vmul.f32 %v282, %v293
      %v322 = vmul.f32 %v283, %v293
      %v323 = vmul.f32 %v284, %v293
      %v324 = vmul.f32 %v285, %v293
      %v325 = vmul.f32 %v286, %v293
      %v326 = vmul.f32 %v287, %v293
      %v327 = vld [vmem:[%s2] sm:$0x1]
      %v329 = vlaneseq
      %v330 = vshrl.u32 %v329, 7
      %v331 = vsub.s32 0, %v330
      %v332 = vrot.slane %v327, %v331
      %v334 = vadd.f32 %v295, %v332
      %v335 = vadd.f32 %v296, %v332
      %v336 = vadd.f32 %v297, %v332
      %v337 = vadd.f32 %v298, %v332
      %v338 = vadd.f32 %v299, %v332
      %v339 = vadd.f32 %v300, %v332
      %v340 = vadd.f32 %v301, %v332
      %v341 = vadd.f32 %v302, %v332
      %v342 = vadd.f32 %v303, %v332
      %v343 = vadd.f32 %v304, %v332
      %v344 = vadd.f32 %v305, %v332
      %v345 = vadd.f32 %v306, %v332
      %v346 = vadd.f32 %v307, %v332
      %v347 = vadd.f32 %v308, %v332
      %v348 = vadd.f32 %v309, %v332
      %v349 = vadd.f32 %v310, %v332
      %v350 = vadd.f32 %v311, %v332
      %v351 = vadd.f32 %v312, %v332
      %v352 = vadd.f32 %v313, %v332
      %v353 = vadd.f32 %v314, %v332
      %v354 = vadd.f32 %v315, %v332
      %v355 = vadd.f32 %v316, %v332
      %v356 = vadd.f32 %v317, %v332
      %v357 = vadd.f32 %v318, %v332
      %v358 = vadd.f32 %v319, %v332
      %v359 = vadd.f32 %v320, %v332
      %v360 = vadd.f32 %v321, %v332
      %v361 = vadd.f32 %v322, %v332
      %v362 = vadd.f32 %v323, %v332
      %v363 = vadd.f32 %v324, %v332
      %v364 = vadd.f32 %v325, %v332
      %v365 = vadd.f32 %v326, %v332
      %v366 = vmax.f32 %v334, 0.0
      %v367 = vmax.f32 %v335, 0.0
      %v368 = vmax.f32 %v336, 0.0
      %v369 = vmax.f32 %v337, 0.0
      %v370 = vmax.f32 %v338, 0.0
      %v371 = vmax.f32 %v339, 0.0
      %v372 = vmax.f32 %v340, 0.0
      %v373 = vmax.f32 %v341, 0.0
      %v374 = vmax.f32 %v342, 0.0
      %v375 = vmax.f32 %v343, 0.0
      %v376 = vmax.f32 %v344, 0.0
      %v377 = vmax.f32 %v345, 0.0
      %v378 = vmax.f32 %v346, 0.0
      %v379 = vmax.f32 %v347, 0.0
      %v380 = vmax.f32 %v348, 0.0
      %v381 = vmax.f32 %v349, 0.0
      %v382 = vmax.f32 %v350, 0.0
      %v383 = vmax.f32 %v351, 0.0
      %v384 = vmax.f32 %v352, 0.0
      %v385 = vmax.f32 %v353, 0.0
      %v386 = vmax.f32 %v354, 0.0
      %v387 = vmax.f32 %v355, 0.0
      %v388 = vmax.f32 %v356, 0.0
      %v389 = vmax.f32 %v357, 0.0
      %v390 = vmax.f32 %v358, 0.0
      %v391 = vmax.f32 %v359, 0.0
      %v392 = vmax.f32 %v360, 0.0
      %v393 = vmax.f32 %v361, 0.0
      %v394 = vmax.f32 %v362, 0.0
      %v395 = vmax.f32 %v363, 0.0
      %v396 = vmax.f32 %v364, 0.0
      %v397 = vmax.f32 %v365, 0.0
      %v398 = vpack.c.bf16 %v367, %v366
      %v399 = vpack.c.bf16 %v369, %v368
      %v400 = vpack.c.bf16 %v371, %v370
      %v401 = vpack.c.bf16 %v373, %v372
      %v402 = vpack.c.bf16 %v375, %v374
      %v403 = vpack.c.bf16 %v377, %v376
      %v404 = vpack.c.bf16 %v379, %v378
      %v405 = vpack.c.bf16 %v381, %v380
      %v406 = vpack.c.bf16 %v383, %v382
      %v407 = vpack.c.bf16 %v385, %v384
      %v408 = vpack.c.bf16 %v387, %v386
      %v409 = vpack.c.bf16 %v389, %v388
      %v410 = vpack.c.bf16 %v391, %v390
      %v411 = vpack.c.bf16 %v393, %v392
      %v412 = vpack.c.bf16 %v395, %v394
      %v413 = vpack.c.bf16 %v397, %v396
      %v414 = vld [vmem:[%s3] sm:$0x3]
      %v415 = vld [vmem:[%s4] sm:$0x1]
      %v417 = vlaneseq
      %v418 = vshrl.u32 %v417, 7
      %v419 = vsub.s32 0, %v418
      %v420 = vrot.slane %v415, %v419
      %vm422 = vcmask 31744
      %v424 = vsel %vm422, %v398, 0
      %v427 = vsel %vm422, %v399, 0
      %v430 = vsel %vm422, %v400, 0
      %v433 = vsel %vm422, %v401, 0
      %v436 = vsel %vm422, %v402, 0
      %v439 = vsel %vm422, %v403, 0
      %v442 = vsel %vm422, %v404, 0
      %v445 = vsel %vm422, %v405, 0
      %v448 = vsel %vm422, %v406, 0
      %v451 = vsel %vm422, %v407, 0
      %v454 = vsel %vm422, %v408, 0
      %v457 = vsel %vm422, %v409, 0
      %v460 = vsel %vm422, %v410, 0
      %v463 = vsel %vm422, %v411, 0
      %v466 = vsel %vm422, %v412, 0
      %v469 = vsel %vm422, %v413, 0
      %vm471 = vcmask 1041408
      %v473 = vsel %vm471, %v414, 0
      %475 = vmatprep.subr.bf16.mxu0 0
      %476 = vmatpush1.bf16.msra.mxu0 %v473
      %477 = vmatprep.subr.bf16.mxu0 0
      %478 = vmatpush1.bf16.msra.mxu0 0
      %479 = vmatprep.subr.bf16.mxu0 0
      %480 = vmatpush1.bf16.msra.mxu0 0
      %481 = vmatprep.subr.bf16.mxu0 0
      %482 = vmatpush1.bf16.msra.mxu0 0
      %483 = vmatprep.subr.bf16.mxu0 0
      %484 = vmatpush1.bf16.msra.mxu0 0
      %485 = vmatprep.subr.bf16.mxu0 0
      %486 = vmatpush1.bf16.msra.mxu0 0
      %487 = vmatprep.subr.bf16.mxu0 0
      %488 = vmatpush1.bf16.msra.mxu0 0
      %489 = vmatprep.subr.bf16.mxu0 0
      %490 = vmatpush1.bf16.msra.mxu0 0
      %491 = vmatprep.subr.bf16.mxu0 0
      %492 = vmatpush1.bf16.msra.mxu0 0
      %493 = vmatprep.subr.bf16.mxu0 0
      %494 = vmatpush1.bf16.msra.mxu0 0
      %495 = vmatprep.subr.bf16.mxu0 0
      %496 = vmatpush1.bf16.msra.mxu0 0
      %497 = vmatprep.subr.bf16.mxu0 0
      %498 = vmatpush1.bf16.msra.mxu0 0
      %499 = vmatprep.subr.bf16.mxu0 0
      %500 = vmatpush1.bf16.msra.mxu0 0
      %501 = vmatprep.subr.bf16.mxu0 0
      %502 = vmatpush1.bf16.msra.mxu0 0
      %503 = vmatprep.subr.bf16.mxu0 0
      %504 = vmatpush1.bf16.msra.mxu0 0
      %505 = vmatprep.subr.bf16.mxu0 0
      %506 = vmatpush1.bf16.msra.mxu0 0
      %507 = vmatprep.mubr.bf16.mxu0 0
      %508 = vmatmul.mubr.bf16.gmra.mrb[0].mxu0 %v424
      %v509 = vpop.f32.mrb[0].mxu0
      %v510 = vadd.f32 %v420, %v509
      %v511 = vpop.f32.mrb[0].mxu0
      %v512 = vpop.f32.mrb[0].mxu0
      %v513 = vadd.f32 %v420, %v512
      %v514 = vpop.f32.mrb[0].mxu0
      %515 = vmatprep.mubr.bf16.mxu0 0
      %516 = vmatmul.mubr.bf16.gmra.mrb[0].mxu0 %v427
      %v517 = vpop.f32.mrb[0].mxu0
      %v518 = vadd.f32 %v420, %v517
      %v519 = vpop.f32.mrb[0].mxu0
      %v520 = vpop.f32.mrb[0].mxu0
      %v521 = vadd.f32 %v420, %v520
      %v522 = vpop.f32.mrb[0].mxu0
      %523 = vmatprep.mubr.bf16.mxu0 0
      %524 = vmatmul.mubr.bf16.gmra.mrb[0].mxu0 %v430
      %v525 = vpop.f32.mrb[0].mxu0
      %v526 = vadd.f32 %v420, %v525
      %v527 = vpop.f32.mrb[0].mxu0
      %v528 = vpop.f32.mrb[0].mxu0
      %v529 = vadd.f32 %v420, %v528
      %v530 = vpop.f32.mrb[0].mxu0
      %531 = vmatprep.mubr.bf16.mxu0 0
      %532 = vmatmul.mubr.bf16.gmra.mrb[0].mxu0 %v433
      %v533 = vpop.f32.mrb[0].mxu0
      %v534 = vadd.f32 %v420, %v533
      %v535 = vpop.f32.mrb[0].mxu0
      %v536 = vpop.f32.mrb[0].mxu0
      %v537 = vadd.f32 %v420, %v536
      %v538 = vpop.f32.mrb[0].mxu0
      %539 = vmatprep.mubr.bf16.mxu0 0
      %540 = vmatmul.mubr.bf16.gmra.mrb[0].mxu0 %v436
      %v541 = vpop.f32.mrb[0].mxu0
      %v542 = vadd.f32 %v420, %v541
      %v543 = vpop.f32.mrb[0].mxu0
      %v544 = vpop.f32.mrb[0].mxu0
      %v545 = vadd.f32 %v420, %v544
      %v546 = vpop.f32.mrb[0].mxu0
      %547 = vmatprep.mubr.bf16.mxu0 0
      %548 = vmatmul.mubr.bf16.gmra.mrb[0].mxu0 %v439
      %v549 = vpop.f32.mrb[0].mxu0
      %v550 = vadd.f32 %v420, %v549
      %v551 = vpop.f32.mrb[0].mxu0
      %v552 = vpop.f32.mrb[0].mxu0
      %v553 = vadd.f32 %v420, %v552
      %v554 = vpop.f32.mrb[0].mxu0
      %555 = vmatprep.mubr.bf16.mxu0 0
      %556 = vmatmul.mubr.bf16.gmra.mrb[0].mxu0 %v442
      %v557 = vpop.f32.mrb[0].mxu0
      %v558 = vadd.f32 %v420, %v557
      %v559 = vpop.f32.mrb[0].mxu0
      %v560 = vpop.f32.mrb[0].mxu0
      %v561 = vadd.f32 %v420, %v560
      %v562 = vpop.f32.mrb[0].mxu0
      %563 = vmatprep.mubr.bf16.mxu0 0
      %564 = vmatmul.mubr.bf16.gmra.mrb[0].mxu0 %v445
      %v565 = vpop.f32.mrb[0].mxu0
      %v566 = vadd.f32 %v420, %v565
      %v567 = vpop.f32.mrb[0].mxu0
      %v568 = vpop.f32.mrb[0].mxu0
      %v569 = vadd.f32 %v420, %v568
      %v570 = vpop.f32.mrb[0].mxu0
      %571 = vmatprep.mubr.bf16.mxu0 0
      %572 = vmatmul.mubr.bf16.gmra.mrb[0].mxu0 %v448
      %v573 = vpop.f32.mrb[0].mxu0
      %v574 = vadd.f32 %v420, %v573
      %v575 = vpop.f32.mrb[0].mxu0
      %v576 = vpop.f32.mrb[0].mxu0
      %v577 = vadd.f32 %v420, %v576
      %v578 = vpop.f32.mrb[0].mxu0
      %579 = vmatprep.mubr.bf16.mxu0 0
      %580 = vmatmul.mubr.bf16.gmra.mrb[0].mxu0 %v451
      %v581 = vpop.f32.mrb[0].mxu0
      %v582 = vadd.f32 %v420, %v581
      %v583 = vpop.f32.mrb[0].mxu0
      %v584 = vpop.f32.mrb[0].mxu0
      %v585 = vadd.f32 %v420, %v584
      %v586 = vpop.f32.mrb[0].mxu0
      %587 = vmatprep.mubr.bf16.mxu0 0
      %588 = vmatmul.mubr.bf16.gmra.mrb[0].mxu0 %v454
      %v589 = vpop.f32.mrb[0].mxu0
      %v590 = vadd.f32 %v420, %v589
      %v591 = vpop.f32.mrb[0].mxu0
      %v592 = vpop.f32.mrb[0].mxu0
      %v593 = vadd.f32 %v420, %v592
      %v594 = vpop.f32.mrb[0].mxu0
      %595 = vmatprep.mubr.bf16.mxu0 0
      %596 = vmatmul.mubr.bf16.gmra.mrb[0].mxu0 %v457
      %v597 = vpop.f32.mrb[0].mxu0
      %v598 = vadd.f32 %v420, %v597
      %v599 = vpop.f32.mrb[0].mxu0
      %v600 = vpop.f32.mrb[0].mxu0
      %v601 = vadd.f32 %v420, %v600
      %v602 = vpop.f32.mrb[0].mxu0
      %603 = vmatprep.mubr.bf16.mxu0 0
      %604 = vmatmul.mubr.bf16.gmra.mrb[0].mxu0 %v460
      %v605 = vpop.f32.mrb[0].mxu0
      %v606 = vadd.f32 %v420, %v605
      %v607 = vpop.f32.mrb[0].mxu0
      %v608 = vpop.f32.mrb[0].mxu0
      %v609 = vadd.f32 %v420, %v608
      %v610 = vpop.f32.mrb[0].mxu0
      %611 = vmatprep.mubr.bf16.mxu0 0
      %612 = vmatmul.mubr.bf16.gmra.mrb[0].mxu0 %v463
      %v613 = vpop.f32.mrb[0].mxu0
      %v614 = vadd.f32 %v420, %v613
      %v615 = vpop.f32.mrb[0].mxu0
      %v616 = vpop.f32.mrb[0].mxu0
      %v617 = vadd.f32 %v420, %v616
      %v618 = vpop.f32.mrb[0].mxu0
      %619 = vmatprep.mubr.bf16.mxu0 0
      %620 = vmatmul.mubr.bf16.gmra.mrb[0].mxu0 %v466
      %v621 = vpop.f32.mrb[0].mxu0
      %v622 = vadd.f32 %v420, %v621
      %v623 = vpop.f32.mrb[0].mxu0
      %v624 = vpop.f32.mrb[0].mxu0
      %v625 = vadd.f32 %v420, %v624
      %v626 = vpop.f32.mrb[0].mxu0
      %627 = vmatprep.mubr.bf16.mxu0 0
      %628 = vmatmul.mubr.bf16.gmra.mrb[0].mxu0 %v469
      %v629 = vpop.f32.mrb[0].mxu0
      %v630 = vadd.f32 %v420, %v629
      %v631 = vpop.f32.mrb[0].mxu0
      %v632 = vpop.f32.mrb[0].mxu0
      %v633 = vadd.f32 %v420, %v632
      %v634 = vpop.f32.mrb[0].mxu0
      %635 = vdwg.mxu0
      %v636 = vmax.f32 %v510, 0.0
      %v637 = vmax.f32 %v513, 0.0
      %v638 = vmax.f32 %v518, 0.0
      %v639 = vmax.f32 %v521, 0.0
      %v640 = vmax.f32 %v526, 0.0
      %v641 = vmax.f32 %v529, 0.0
      %v642 = vmax.f32 %v534, 0.0
      %v643 = vmax.f32 %v537, 0.0
      %v644 = vmax.f32 %v542, 0.0
      %v645 = vmax.f32 %v545, 0.0
      %v646 = vmax.f32 %v550, 0.0
      %v647 = vmax.f32 %v553, 0.0
      %v648 = vmax.f32 %v558, 0.0
      %v649 = vmax.f32 %v561, 0.0
      %v650 = vmax.f32 %v566, 0.0
      %v651 = vmax.f32 %v569, 0.0
      %v652 = vmax.f32 %v574, 0.0
      %v653 = vmax.f32 %v577, 0.0
      %v654 = vmax.f32 %v582, 0.0
      %v655 = vmax.f32 %v585, 0.0
      %v656 = vmax.f32 %v590, 0.0
      %v657 = vmax.f32 %v593, 0.0
      %v658 = vmax.f32 %v598, 0.0
      %v659 = vmax.f32 %v601, 0.0
      %v660 = vmax.f32 %v606, 0.0
      %v661 = vmax.f32 %v609, 0.0
      %v662 = vmax.f32 %v614, 0.0
      %v663 = vmax.f32 %v617, 0.0
      %v664 = vmax.f32 %v622, 0.0
      %v665 = vmax.f32 %v625, 0.0
      %v666 = vmax.f32 %v630, 0.0
      %v667 = vmax.f32 %v633, 0.0
      %vm700 = vcmask 1040384
      %v701 = vrot.slane %v636, 7
      %v702 = vrot.slane %v637, 7
      %v703 = vsel %vm700, %v701, %v702
      %v704 = vrot.slane %v638, 7
      %v705 = vrot.slane %v639, 7
      %v706 = vsel %vm700, %v704, %v705
      %v707 = vrot.slane %v640, 7
      %v708 = vrot.slane %v641, 7
      %v709 = vsel %vm700, %v707, %v708
      %v710 = vrot.slane %v642, 7
      %v711 = vrot.slane %v643, 7
      %v712 = vsel %vm700, %v710, %v711
      %v713 = vrot.slane %v644, 7
      %v714 = vrot.slane %v645, 7
      %v715 = vsel %vm700, %v713, %v714
      %v716 = vrot.slane %v646, 7
      %v717 = vrot.slane %v647, 7
      %v718 = vsel %vm700, %v716, %v717
      %v719 = vrot.slane %v648, 7
      %v720 = vrot.slane %v649, 7
      %v721 = vsel %vm700, %v719, %v720
      %v722 = vrot.slane %v650, 7
      %v723 = vrot.slane %v651, 7
      %v724 = vsel %vm700, %v722, %v723
      %v725 = vrot.slane %v652, 7
      %v726 = vrot.slane %v653, 7
      %v727 = vsel %vm700, %v725, %v726
      %v728 = vrot.slane %v654, 7
      %v729 = vrot.slane %v655, 7
      %v730 = vsel %vm700, %v728, %v729
      %v731 = vrot.slane %v656, 7
      %v732 = vrot.slane %v657, 7
      %v733 = vsel %vm700, %v731, %v732
      %v734 = vrot.slane %v658, 7
      %v735 = vrot.slane %v659, 7
      %v736 = vsel %vm700, %v734, %v735
      %v737 = vrot.slane %v660, 7
      %v738 = vrot.slane %v661, 7
      %v739 = vsel %vm700, %v737, %v738
      %v740 = vrot.slane %v662, 7
      %v741 = vrot.slane %v663, 7
      %v742 = vsel %vm700, %v740, %v741
      %v743 = vrot.slane %v664, 7
      %v744 = vrot.slane %v665, 7
      %v745 = vsel %vm700, %v743, %v744
      %v746 = vrot.slane %v666, 7
      %v747 = vrot.slane %v667, 7
      %v748 = vsel %vm700, %v746, %v747
      %v797 = vsel %vm700, 0.0, %v701
      %v798 = vsel %vm700, 0.0, %v704
      %v799 = vsel %vm700, 0.0, %v707
      %v800 = vsel %vm700, 0.0, %v710
      %v801 = vsel %vm700, 0.0, %v713
      %v802 = vsel %vm700, 0.0, %v716
      %v803 = vsel %vm700, 0.0, %v719
      %v804 = vsel %vm700, 0.0, %v722
      %v805 = vsel %vm700, 0.0, %v725
      %v806 = vsel %vm700, 0.0, %v728
      %v807 = vsel %vm700, 0.0, %v731
      %v808 = vsel %vm700, 0.0, %v734
      %v809 = vsel %vm700, 0.0, %v737
      %v810 = vsel %vm700, 0.0, %v740
      %v811 = vsel %vm700, 0.0, %v743
      %v812 = vsel %vm700, 0.0, %v746
      %v813 = vsel %vm700, %v702, 0.0
      %v814 = vsel %vm700, %v705, 0.0
      %v815 = vsel %vm700, %v708, 0.0
      %v816 = vsel %vm700, %v711, 0.0
      %v817 = vsel %vm700, %v714, 0.0
      %v818 = vsel %vm700, %v717, 0.0
      %v819 = vsel %vm700, %v720, 0.0
      %v820 = vsel %vm700, %v723, 0.0
      %v821 = vsel %vm700, %v726, 0.0
      %v822 = vsel %vm700, %v729, 0.0
      %v823 = vsel %vm700, %v732, 0.0
      %v824 = vsel %vm700, %v735, 0.0
      %v825 = vsel %vm700, %v738, 0.0
      %v826 = vsel %vm700, %v741, 0.0
      %v827 = vsel %vm700, %v744, 0.0
      %v828 = vsel %vm700, %v747, 0.0
      %829 = vst [vmem:[#allocation2] sm:$0xf] 0
      %830 = vst [vmem:[#allocation2 + $0x4] sm:$0xf] 0
      %831 = vst [vmem:[#allocation2 + $0x8] sm:$0xf] 0
      %s832 = scalar_lea.vmem [#allocation2], 204
      %833 = vst [vmem:[%s832] sm:$0xf] 0
      %834 = vst [vmem:[%s832 + $0x4] sm:$0xf] 0
      %835 = vst [vmem:[%s832 + $0x8] sm:$0xf] 0
      %v836 = vpack.c.bf16 %v703, %v797
      %v837 = vpack.c.bf16 %v813, %v813
      %v838 = vpack.c.bf16 %v706, %v798
      %v839 = vpack.c.bf16 %v814, %v814
      %v840 = vpack.c.bf16 %v709, %v799
      %v841 = vpack.c.bf16 %v815, %v815
      %v842 = vpack.c.bf16 %v712, %v800
      %v843 = vpack.c.bf16 %v816, %v816
      %v844 = vpack.c.bf16 %v715, %v801
      %v845 = vpack.c.bf16 %v817, %v817
      %v846 = vpack.c.bf16 %v718, %v802
      %v847 = vpack.c.bf16 %v818, %v818
      %v848 = vpack.c.bf16 %v721, %v803
      %v849 = vpack.c.bf16 %v819, %v819
      %v850 = vpack.c.bf16 %v724, %v804
      %v851 = vpack.c.bf16 %v820, %v820
      %v852 = vpack.c.bf16 %v727, %v805
      %v853 = vpack.c.bf16 %v821, %v821
      %v854 = vpack.c.bf16 %v730, %v806
      %v855 = vpack.c.bf16 %v822, %v822
      %v856 = vpack.c.bf16 %v733, %v807
      %v857 = vpack.c.bf16 %v823, %v823
      %v858 = vpack.c.bf16 %v736, %v808
      %v859 = vpack.c.bf16 %v824, %v824
      %v860 = vpack.c.bf16 %v739, %v809
      %v861 = vpack.c.bf16 %v825, %v825
      %v862 = vpack.c.bf16 %v742, %v810
      %v863 = vpack.c.bf16 %v826, %v826
      %v864 = vpack.c.bf16 %v745, %v811
      %v865 = vpack.c.bf16 %v827, %v827
      %v866 = vpack.c.bf16 %v748, %v812
      %v867 = vpack.c.bf16 %v828, %v828
      %v900 = vunpack.c.l.b16 %v836
      %v901 = vunpack.c.h.b16 %v836
      %v902 = vunpack.c.l.b16 %v837
      %v903 = vunpack.c.l.b16 %v838
      %v904 = vunpack.c.h.b16 %v838
      %v905 = vunpack.c.l.b16 %v839
      %v906 = vunpack.c.l.b16 %v840
      %v907 = vunpack.c.h.b16 %v840
      %v908 = vunpack.c.l.b16 %v841
      %v909 = vunpack.c.l.b16 %v842
      %v910 = vunpack.c.h.b16 %v842
      %v911 = vunpack.c.l.b16 %v843
      %v912 = vunpack.c.l.b16 %v844
      %v913 = vunpack.c.h.b16 %v844
      %v914 = vunpack.c.l.b16 %v845
      %v915 = vunpack.c.l.b16 %v846
      %v916 = vunpack.c.h.b16 %v846
      %v917 = vunpack.c.l.b16 %v847
      %v918 = vunpack.c.l.b16 %v848
      %v919 = vunpack.c.h.b16 %v848
      %v920 = vunpack.c.l.b16 %v849
      %v921 = vunpack.c.l.b16 %v850
      %v922 = vunpack.c.h.b16 %v850
      %v923 = vunpack.c.l.b16 %v851
      %v924 = vunpack.c.l.b16 %v852
      %v925 = vunpack.c.h.b16 %v852
      %v926 = vunpack.c.l.b16 %v853
      %v927 = vunpack.c.l.b16 %v854
      %v928 = vunpack.c.h.b16 %v854
      %v929 = vunpack.c.l.b16 %v855
      %v930 = vunpack.c.l.b16 %v856
      %v931 = vunpack.c.h.b16 %v856
      %v932 = vunpack.c.l.b16 %v857
      %v933 = vunpack.c.l.b16 %v858
      %v934 = vunpack.c.h.b16 %v858
      %v935 = vunpack.c.l.b16 %v859
      %v936 = vunpack.c.l.b16 %v860
      %v937 = vunpack.c.h.b16 %v860
      %v938 = vunpack.c.l.b16 %v861
      %v939 = vunpack.c.l.b16 %v862
      %v940 = vunpack.c.h.b16 %v862
      %v941 = vunpack.c.l.b16 %v863
      %v942 = vunpack.c.l.b16 %v864
      %v943 = vunpack.c.h.b16 %v864
      %v944 = vunpack.c.l.b16 %v865
      %v945 = vunpack.c.l.b16 %v866
      %v946 = vunpack.c.h.b16 %v866
      %v947 = vunpack.c.l.b16 %v867
      %v948 = vpack.c.b16 %v900, %v900
      %v949 = vpack.c.b16 %v901, %v901
      %v950 = vpack.c.b16 %v902, %v902
      %v951 = vpack.c.b16 %v903, %v903
      %v952 = vpack.c.b16 %v904, %v904
      %v953 = vpack.c.b16 %v905, %v905
      %v954 = vpack.c.b16 %v906, %v906
      %v955 = vpack.c.b16 %v907, %v907
      %v956 = vpack.c.b16 %v908, %v908
      %v957 = vpack.c.b16 %v909, %v909
      %v958 = vpack.c.b16 %v910, %v910
      %v959 = vpack.c.b16 %v911, %v911
      %v960 = vpack.c.b16 %v912, %v912
      %v961 = vpack.c.b16 %v913, %v913
      %v962 = vpack.c.b16 %v914, %v914
      %v963 = vpack.c.b16 %v915, %v915
      %v964 = vpack.c.b16 %v916, %v916
      %v965 = vpack.c.b16 %v917, %v917
      %v966 = vpack.c.b16 %v918, %v918
      %v967 = vpack.c.b16 %v919, %v919
      %v968 = vpack.c.b16 %v920, %v920
      %v969 = vpack.c.b16 %v921, %v921
      %v970 = vpack.c.b16 %v922, %v922
      %v971 = vpack.c.b16 %v923, %v923
      %v972 = vpack.c.b16 %v924, %v924
      %v973 = vpack.c.b16 %v925, %v925
      %v974 = vpack.c.b16 %v926, %v926
      %v975 = vpack.c.b16 %v927, %v927
      %v976 = vpack.c.b16 %v928, %v928
      %v977 = vpack.c.b16 %v929, %v929
      %v978 = vpack.c.b16 %v930, %v930
      %v979 = vpack.c.b16 %v931, %v931
      %v980 = vpack.c.b16 %v932, %v932
      %v981 = vpack.c.b16 %v933, %v933
      %v982 = vpack.c.b16 %v934, %v934
      %v983 = vpack.c.b16 %v935, %v935
      %v984 = vpack.c.b16 %v936, %v936
      %v985 = vpack.c.b16 %v937, %v937
      %v986 = vpack.c.b16 %v938, %v938
      %v987 = vpack.c.b16 %v939, %v939
      %v988 = vpack.c.b16 %v940, %v940
      %v989 = vpack.c.b16 %v941, %v941
      %v990 = vpack.c.b16 %v942, %v942
      %v991 = vpack.c.b16 %v943, %v943
      %v992 = vpack.c.b16 %v944, %v944
      %v993 = vpack.c.b16 %v945, %v945
      %v994 = vpack.c.b16 %v946, %v946
      %v995 = vpack.c.b16 %v947, %v947
      %s1044 = scalar_lea.vmem [#allocation2], 12
      %1045 = vst [vmem:[%s1044] sm:$0xf] %v948
      %1046 = vst [vmem:[%s1044 + $0x4] sm:$0xf] %v949
      %1047 = vst [vmem:[%s1044 + $0x8] sm:$0x1] %v950
      %1048 = vst [vmem:[%s1044 + $0xc] sm:$0xf] %v951
      %1049 = vst [vmem:[%s1044 + $0x10] sm:$0xf] %v952
      %1050 = vst [vmem:[%s1044 + $0x14] sm:$0x1] %v953
      %1051 = vst [vmem:[%s1044 + $0x18] sm:$0xf] %v954
      %1052 = vst [vmem:[%s1044 + $0x1c] sm:$0xf] %v955
      %1053 = vst [vmem:[%s1044 + $0x20] sm:$0x1] %v956
      %1054 = vst [vmem:[%s1044 + $0x24] sm:$0xf] %v957
      %1055 = vst [vmem:[%s1044 + $0x28] sm:$0xf] %v958
      %1056 = vst [vmem:[%s1044 + $0x2c] sm:$0x1] %v959
      %1057 = vst [vmem:[%s1044 + $0x30] sm:$0xf] %v960
      %1058 = vst [vmem:[%s1044 + $0x34] sm:$0xf] %v961
      %1059 = vst [vmem:[%s1044 + $0x38] sm:$0x1] %v962
      %1060 = vst [vmem:[%s1044 + $0x3c] sm:$0xf] %v963
      %1061 = vst [vmem:[%s1044 + $0x40] sm:$0xf] %v964
      %1062 = vst [vmem:[%s1044 + $0x44] sm:$0x1] %v965
      %1063 = vst [vmem:[%s1044 + $0x48] sm:$0xf] %v966
      %1064 = vst [vmem:[%s1044 + $0x4c] sm:$0xf] %v967
      %1065 = vst [vmem:[%s1044 + $0x50] sm:$0x1] %v968
      %1066 = vst [vmem:[%s1044 + $0x54] sm:$0xf] %v969
      %1067 = vst [vmem:[%s1044 + $0x58] sm:$0xf] %v970
      %1068 = vst [vmem:[%s1044 + $0x5c] sm:$0x1] %v971
      %1069 = vst [vmem:[%s1044 + $0x60] sm:$0xf] %v972
      %1070 = vst [vmem:[%s1044 + $0x64] sm:$0xf] %v973
      %1071 = vst [vmem:[%s1044 + $0x68] sm:$0x1] %v974
      %1072 = vst [vmem:[%s1044 + $0x6c] sm:$0xf] %v975
      %1073 = vst [vmem:[%s1044 + $0x70] sm:$0xf] %v976
      %1074 = vst [vmem:[%s1044 + $0x74] sm:$0x1] %v977
      %1075 = vst [vmem:[%s1044 + $0x78] sm:$0xf] %v978
      %1076 = vst [vmem:[%s1044 + $0x7c] sm:$0xf] %v979
      %1077 = vst [vmem:[%s1044 + $0x80] sm:$0x1] %v980
      %1078 = vst [vmem:[%s1044 + $0x84] sm:$0xf] %v981
      %1079 = vst [vmem:[%s1044 + $0x88] sm:$0xf] %v982
      %1080 = vst [vmem:[%s1044 + $0x8c] sm:$0x1] %v983
      %1081 = vst [vmem:[%s1044 + $0x90] sm:$0xf] %v984
      %1082 = vst [vmem:[%s1044 + $0x94] sm:$0xf] %v985
      %1083 = vst [vmem:[%s1044 + $0x98] sm:$0x1] %v986
      %1084 = vst [vmem:[%s1044 + $0x9c] sm:$0xf] %v987
      %1085 = vst [vmem:[%s1044 + $0xa0] sm:$0xf] %v988
      %1086 = vst [vmem:[%s1044 + $0xa4] sm:$0x1] %v989
      %1087 = vst [vmem:[%s1044 + $0xa8] sm:$0xf] %v990
      %1088 = vst [vmem:[%s1044 + $0xac] sm:$0xf] %v991
      %1089 = vst [vmem:[%s1044 + $0xb0] sm:$0x1] %v992
      %1090 = vst [vmem:[%s1044 + $0xb4] sm:$0xf] %v993
      %1091 = vst [vmem:[%s1044 + $0xb8] sm:$0xf] %v994
      %1092 = vst [vmem:[%s1044 + $0xbc] sm:$0x1] %v995
      %v1093 = vlaneseq
      %v1094 = vand.u32 %v1093, 127
      %v1095 = vld [vmem:[#allocation2] sm:$0xf]
      %v1096 = vld [vmem:[#allocation2 + $0x4] sm:$0xf]
      %v1097 = vld [vmem:[#allocation2 + $0x8] sm:$0xf]
      %v1098 = vld [vmem:[#allocation2 + $0xc] sm:$0xf]
      %v1099 = vld [vmem:[#allocation2 + $0x10] sm:$0xf]
      %v1100 = vld [vmem:[#allocation2 + $0x14] sm:$0xf]
      %v1101 = vld [vmem:[#allocation2 + $0x18] sm:$0xf]
      %v1102 = vld [vmem:[#allocation2 + $0x1c] sm:$0xf]
      %v1103 = vld [vmem:[#allocation2 + $0x20] sm:$0xf]
      %v1104 = vld [vmem:[#allocation2 + $0x24] sm:$0xf]
      %v1105 = vld [vmem:[#allocation2 + $0x28] sm:$0xf]
      %v1106 = vld [vmem:[#allocation2 + $0x2c] sm:$0xf]
      %v1107 = vld [vmem:[#allocation2 + $0x30] sm:$0xf]
      %v1108 = vld [vmem:[#allocation2 + $0x34] sm:$0xf]
      %v1109 = vld [vmem:[#allocation2 + $0x38] sm:$0xf]
      %v1110 = vld [vmem:[#allocation2 + $0x3c] sm:$0xf]
      %v1111 = vld [vmem:[#allocation2 + $0x40] sm:$0xf]
      %v1112 = vld [vmem:[#allocation2 + $0x44] sm:$0xf]
      %v1113 = vld [vmem:[#allocation2 + $0x48] sm:$0xf]
      %v1114 = vld [vmem:[#allocation2 + $0x4c] sm:$0xf]
      %v1115 = vld [vmem:[#allocation2 + $0x50] sm:$0xf]
      %v1116 = vld [vmem:[#allocation2 + $0x54] sm:$0xf]
      %v1117 = vld [vmem:[#allocation2 + $0x58] sm:$0xf]
      %v1118 = vld [vmem:[#allocation2 + $0x5c] sm:$0xf]
      %v1119 = vld [vmem:[#allocation2 + $0x60] sm:$0xf]
      %v1120 = vld [vmem:[#allocation2 + $0x64] sm:$0xf]
      %v1121 = vld [vmem:[#allocation2 + $0x68] sm:$0xf]
      %v1122 = vld [vmem:[#allocation2 + $0x6c] sm:$0xf]
      %v1123 = vld [vmem:[#allocation2 + $0x70] sm:$0xf]
      %v1124 = vld [vmem:[#allocation2 + $0x74] sm:$0xf]
      %v1125 = vld [vmem:[#allocation2 + $0x78] sm:$0xf]
      %v1126 = vld [vmem:[#allocation2 + $0x7c] sm:$0xf]
      %v1127 = vld [vmem:[#allocation2 + $0x80] sm:$0xf]
      %v1128 = vld [vmem:[#allocation2 + $0x84] sm:$0xf]
      %v1129 = vld [vmem:[#allocation2 + $0x88] sm:$0xf]
      %v1130 = vld [vmem:[#allocation2 + $0x8c] sm:$0xf]
      %v1131 = vld [vmem:[#allocation2 + $0x90] sm:$0xf]
      %v1132 = vld [vmem:[#allocation2 + $0x94] sm:$0xf]
      %v1133 = vld [vmem:[#allocation2 + $0x98] sm:$0xf]
      %v1134 = vld [vmem:[#allocation2 + $0x9c] sm:$0xf]
      %v1135 = vld [vmem:[#allocation2 + $0xa0] sm:$0xf]
      %v1136 = vld [vmem:[#allocation2 + $0xa4] sm:$0xf]
      %v1137 = vld [vmem:[#allocation2 + $0xa8] sm:$0xf]
      %v1138 = vld [vmem:[#allocation2 + $0xac] sm:$0xf]
      %v1139 = vld [vmem:[#allocation2 + $0xb0] sm:$0xf]
      %v1140 = vld [vmem:[#allocation2 + $0xb4] sm:$0xf]
      %v1141 = vld [vmem:[#allocation2 + $0xb8] sm:$0xf]
      %v1142 = vld [vmem:[#allocation2 + $0xbc] sm:$0xf]
      %v1143 = vunpack.c.l.bf16 %v1095
      %v1144 = vunpack.c.l.bf16 %v1096
      %v1145 = vunpack.c.l.bf16 %v1097
      %v1146 = vunpack.c.l.bf16 %v1098
      %v1147 = vunpack.c.l.bf16 %v1099
      %v1148 = vunpack.c.l.bf16 %v1100
      %v1149 = vunpack.c.l.bf16 %v1101
      %v1150 = vunpack.c.l.bf16 %v1102
      %v1151 = vunpack.c.l.bf16 %v1103
      %v1152 = vunpack.c.l.bf16 %v1104
      %v1153 = vunpack.c.l.bf16 %v1105
      %v1154 = vunpack.c.l.bf16 %v1106
      %v1155 = vunpack.c.l.bf16 %v1107
      %v1156 = vunpack.c.l.bf16 %v1108
      %v1157 = vunpack.c.l.bf16 %v1109
      %v1158 = vunpack.c.l.bf16 %v1110
      %v1159 = vunpack.c.l.bf16 %v1111
      %v1160 = vunpack.c.l.bf16 %v1112
      %v1161 = vunpack.c.l.bf16 %v1113
      %v1162 = vunpack.c.l.bf16 %v1114
      %v1163 = vunpack.c.l.bf16 %v1115
      %v1164 = vunpack.c.l.bf16 %v1116
      %v1165 = vunpack.c.l.bf16 %v1117
      %v1166 = vunpack.c.l.bf16 %v1118
      %v1167 = vunpack.c.l.bf16 %v1119
      %v1168 = vunpack.c.l.bf16 %v1120
      %v1169 = vunpack.c.l.bf16 %v1121
      %v1170 = vunpack.c.l.bf16 %v1122
      %v1171 = vunpack.c.l.bf16 %v1123
      %v1172 = vunpack.c.l.bf16 %v1124
      %v1173 = vunpack.c.l.bf16 %v1125
      %v1174 = vunpack.c.l.bf16 %v1126
      %v1175 = vunpack.c.l.bf16 %v1127
      %v1176 = vunpack.c.l.bf16 %v1128
      %v1177 = vunpack.c.l.bf16 %v1129
      %v1178 = vunpack.c.l.bf16 %v1130
      %v1179 = vunpack.c.l.bf16 %v1131
      %v1180 = vunpack.c.l.bf16 %v1132
      %v1181 = vunpack.c.l.bf16 %v1133
      %v1182 = vunpack.c.l.bf16 %v1134
      %v1183 = vunpack.c.l.bf16 %v1135
      %v1184 = vunpack.c.l.bf16 %v1136
      %v1185 = vunpack.c.l.bf16 %v1137
      %v1186 = vunpack.c.l.bf16 %v1138
      %v1187 = vunpack.c.l.bf16 %v1139
      %v1188 = vunpack.c.l.bf16 %v1140
      %v1189 = vunpack.c.l.bf16 %v1141
      %v1190 = vunpack.c.l.bf16 %v1142
      %vm1191 = vcmp.lt.s32.totalorder %v1094, 32
      %vm1192 = vcmp.lt.s32.totalorder %v1094, 64
      %v1193 = vsel %vm1192, 1, 0
      %vm1194 = vcmp.eq.s32.totalorder %v1193, 1
      %vm1243 = vcmask 1046528
      %v1244 = vrot.slane %v1143, 1
      %v1245 = vrot.slane %v1144, 1
      %v1246 = vsel %vm1243, %v1244, %v1245
      %v1247 = vrot.slane %v1145, 1
      %v1248 = vsel %vm1243, %v1245, %v1247
      %v1249 = vrot.slane %v1146, 1
      %v1250 = vrot.slane %v1147, 1
      %v1251 = vsel %vm1243, %v1249, %v1250
      %v1252 = vrot.slane %v1148, 1
      %v1253 = vsel %vm1243, %v1250, %v1252
      %v1254 = vrot.slane %v1149, 1
      %v1255 = vrot.slane %v1150, 1
      %v1256 = vsel %vm1243, %v1254, %v1255
      %v1257 = vrot.slane %v1151, 1
      %v1258 = vsel %vm1243, %v1255, %v1257
      %v1259 = vrot.slane %v1152, 1
      %v1260 = vrot.slane %v1153, 1
      %v1261 = vsel %vm1243, %v1259, %v1260
      %v1262 = vrot.slane %v1154, 1
      %v1263 = vsel %vm1243, %v1260, %v1262
      %v1264 = vrot.slane %v1155, 1
      %v1265 = vrot.slane %v1156, 1
      %v1266 = vsel %vm1243, %v1264, %v1265
      %v1267 = vrot.slane %v1157, 1
      %v1268 = vsel %vm1243, %v1265, %v1267
      %v1269 = vrot.slane %v1158, 1
      %v1270 = vrot.slane %v1159, 1
      %v1271 = vsel %vm1243, %v1269, %v1270
      %v1272 = vrot.slane %v1160, 1
      %v1273 = vsel %vm1243, %v1270, %v1272
      %v1274 = vrot.slane %v1161, 1
      %v1275 = vrot.slane %v1162, 1
      %v1276 = vsel %vm1243, %v1274, %v1275
      %v1277 = vrot.slane %v1163, 1
      %v1278 = vsel %vm1243, %v1275, %v1277
      %v1279 = vrot.slane %v1164, 1
      %v1280 = vrot.slane %v1165, 1
      %v1281 = vsel %vm1243, %v1279, %v1280
      %v1282 = vrot.slane %v1166, 1
      %v1283 = vsel %vm1243, %v1280, %v1282
      %v1284 = vrot.slane %v1167, 1
      %v1285 = vrot.slane %v1168, 1
      %v1286 = vsel %vm1243, %v1284, %v1285
      %v1287 = vrot.slane %v1169, 1
      %v1288 = vsel %vm1243, %v1285, %v1287
      %v1289 = vrot.slane %v1170, 1
      %v1290 = vrot.slane %v1171, 1
      %v1291 = vsel %vm1243, %v1289, %v1290
      %v1292 = vrot.slane %v1172, 1
      %v1293 = vsel %vm1243, %v1290, %v1292
      %v1294 = vrot.slane %v1173, 1
      %v1295 = vrot.slane %v1174, 1
      %v1296 = vsel %vm1243, %v1294, %v1295
      %v1297 = vrot.slane %v1175, 1
      %v1298 = vsel %vm1243, %v1295, %v1297
      %v1299 = vrot.slane %v1176, 1
      %v1300 = vrot.slane %v1177, 1
      %v1301 = vsel %vm1243, %v1299, %v1300
      %v1302 = vrot.slane %v1178, 1
      %v1303 = vsel %vm1243, %v1300, %v1302
      %v1304 = vrot.slane %v1179, 1
      %v1305 = vrot.slane %v1180, 1
      %v1306 = vsel %vm1243, %v1304, %v1305
      %v1307 = vrot.slane %v1181, 1
      %v1308 = vsel %vm1243, %v1305, %v1307
      %v1309 = vrot.slane %v1182, 1
      %v1310 = vrot.slane %v1183, 1
      %v1311 = vsel %vm1243, %v1309, %v1310
      %v1312 = vrot.slane %v1184, 1
      %v1313 = vsel %vm1243, %v1310, %v1312
      %v1314 = vrot.slane %v1185, 1
      %v1315 = vrot.slane %v1186, 1
      %v1316 = vsel %vm1243, %v1314, %v1315
      %v1317 = vrot.slane %v1187, 1
      %v1318 = vsel %vm1243, %v1315, %v1317
      %v1319 = vrot.slane %v1188, 1
      %v1320 = vrot.slane %v1189, 1
      %v1321 = vsel %vm1243, %v1319, %v1320
      %v1322 = vrot.slane %v1190, 1
      %v1323 = vsel %vm1243, %v1320, %v1322
      %v1372 = vsel %vm1194, %v1143, %v1246
      %v1373 = vsel %vm1194, %v1144, %v1248
      %v1374 = vsel %vm1194, %v1145, %v1247
      %v1375 = vsel %vm1194, %v1146, %v1251
      %v1376 = vsel %vm1194, %v1147, %v1253
      %v1377 = vsel %vm1194, %v1148, %v1252
      %v1378 = vsel %vm1194, %v1149, %v1256
      %v1379 = vsel %vm1194, %v1150, %v1258
      %v1380 = vsel %vm1194, %v1151, %v1257
      %v1381 = vsel %vm1194, %v1152, %v1261
      %v1382 = vsel %vm1194, %v1153, %v1263
      %v1383 = vsel %vm1194, %v1154, %v1262
      %v1384 = vsel %vm1194, %v1155, %v1266
      %v1385 = vsel %vm1194, %v1156, %v1268
      %v1386 = vsel %vm1194, %v1157, %v1267
      %v1387 = vsel %vm1194, %v1158, %v1271
      %v1388 = vsel %vm1194, %v1159, %v1273
      %v1389 = vsel %vm1194, %v1160, %v1272
      %v1390 = vsel %vm1194, %v1161, %v1276
      %v1391 = vsel %vm1194, %v1162, %v1278
      %v1392 = vsel %vm1194, %v1163, %v1277
      %v1393 = vsel %vm1194, %v1164, %v1281
      %v1394 = vsel %vm1194, %v1165, %v1283
      %v1395 = vsel %vm1194, %v1166, %v1282
      %v1396 = vsel %vm1194, %v1167, %v1286
      %v1397 = vsel %vm1194, %v1168, %v1288
      %v1398 = vsel %vm1194, %v1169, %v1287
      %v1399 = vsel %vm1194, %v1170, %v1291
      %v1400 = vsel %vm1194, %v1171, %v1293
      %v1401 = vsel %vm1194, %v1172, %v1292
      %v1402 = vsel %vm1194, %v1173, %v1296
      %v1403 = vsel %vm1194, %v1174, %v1298
      %v1404 = vsel %vm1194, %v1175, %v1297
      %v1405 = vsel %vm1194, %v1176, %v1301
      %v1406 = vsel %vm1194, %v1177, %v1303
      %v1407 = vsel %vm1194, %v1178, %v1302
      %v1408 = vsel %vm1194, %v1179, %v1306
      %v1409 = vsel %vm1194, %v1180, %v1308
      %v1410 = vsel %vm1194, %v1181, %v1307
      %v1411 = vsel %vm1194, %v1182, %v1311
      %v1412 = vsel %vm1194, %v1183, %v1313
      %v1413 = vsel %vm1194, %v1184, %v1312
      %v1414 = vsel %vm1194, %v1185, %v1316
      %v1415 = vsel %vm1194, %v1186, %v1318
      %v1416 = vsel %vm1194, %v1187, %v1317
      %v1417 = vsel %vm1194, %v1188, %v1321
      %v1418 = vsel %vm1194, %v1189, %v1323
      %v1419 = vsel %vm1194, %v1190, %v1322
      %v1420 = vsel %vm1191, 1, 0
      %vm1421 = vcmp.eq.s32.totalorder %v1420, 1
      %v1470 = vrot.slane %v1372, 1
      %v1471 = vrot.slane %v1373, 1
      %v1472 = vsel %vm1243, %v1470, %v1471
      %v1473 = vrot.slane %v1374, 1
      %v1474 = vsel %vm1243, %v1471, %v1473
      %v1475 = vrot.slane %v1375, 1
      %v1476 = vrot.slane %v1376, 1
      %v1477 = vsel %vm1243, %v1475, %v1476
      %v1478 = vrot.slane %v1377, 1
      %v1479 = vsel %vm1243, %v1476, %v1478
      %v1480 = vrot.slane %v1378, 1
      %v1481 = vrot.slane %v1379, 1
      %v1482 = vsel %vm1243, %v1480, %v1481
      %v1483 = vrot.slane %v1380, 1
      %v1484 = vsel %vm1243, %v1481, %v1483
      %v1485 = vrot.slane %v1381, 1
      %v1486 = vrot.slane %v1382, 1
      %v1487 = vsel %vm1243, %v1485, %v1486
      %v1488 = vrot.slane %v1383, 1
      %v1489 = vsel %vm1243, %v1486, %v1488
      %v1490 = vrot.slane %v1384, 1
      %v1491 = vrot.slane %v1385, 1
      %v1492 = vsel %vm1243, %v1490, %v1491
      %v1493 = vrot.slane %v1386, 1
      %v1494 = vsel %vm1243, %v1491, %v1493
      %v1495 = vrot.slane %v1387, 1
      %v1496 = vrot.slane %v1388, 1
      %v1497 = vsel %vm1243, %v1495, %v1496
      %v1498 = vrot.slane %v1389, 1
      %v1499 = vsel %vm1243, %v1496, %v1498
      %v1500 = vrot.slane %v1390, 1
      %v1501 = vrot.slane %v1391, 1
      %v1502 = vsel %vm1243, %v1500, %v1501
      %v1503 = vrot.slane %v1392, 1
      %v1504 = vsel %vm1243, %v1501, %v1503
      %v1505 = vrot.slane %v1393, 1
      %v1506 = vrot.slane %v1394, 1
      %v1507 = vsel %vm1243, %v1505, %v1506
      %v1508 = vrot.slane %v1395, 1
      %v1509 = vsel %vm1243, %v1506, %v1508
      %v1510 = vrot.slane %v1396, 1
      %v1511 = vrot.slane %v1397, 1
      %v1512 = vsel %vm1243, %v1510, %v1511
      %v1513 = vrot.slane %v1398, 1
      %v1514 = vsel %vm1243, %v1511, %v1513
      %v1515 = vrot.slane %v1399, 1
      %v1516 = vrot.slane %v1400, 1
      %v1517 = vsel %vm1243, %v1515, %v1516
      %v1518 = vrot.slane %v1401, 1
      %v1519 = vsel %vm1243, %v1516, %v1518
      %v1520 = vrot.slane %v1402, 1
      %v1521 = vrot.slane %v1403, 1
      %v1522 = vsel %vm1243, %v1520, %v1521
      %v1523 = vrot.slane %v1404, 1
      %v1524 = vsel %vm1243, %v1521, %v1523
      %v1525 = vrot.slane %v1405, 1
      %v1526 = vrot.slane %v1406, 1
      %v1527 = vsel %vm1243, %v1525, %v1526
      %v1528 = vrot.slane %v1407, 1
      %v1529 = vsel %vm1243, %v1526, %v1528
      %v1530 = vrot.slane %v1408, 1
      %v1531 = vrot.slane %v1409, 1
      %v1532 = vsel %vm1243, %v1530, %v1531
      %v1533 = vrot.slane %v1410, 1
      %v1534 = vsel %vm1243, %v1531, %v1533
      %v1535 = vrot.slane %v1411, 1
      %v1536 = vrot.slane %v1412, 1
      %v1537 = vsel %vm1243, %v1535, %v1536
      %v1538 = vrot.slane %v1413, 1
      %v1539 = vsel %vm1243, %v1536, %v1538
      %v1540 = vrot.slane %v1414, 1
      %v1541 = vrot.slane %v1415, 1
      %v1542 = vsel %vm1243, %v1540, %v1541
      %v1543 = vrot.slane %v1416, 1
      %v1544 = vsel %vm1243, %v1541, %v1543
      %v1545 = vrot.slane %v1417, 1
      %v1546 = vrot.slane %v1418, 1
      %v1547 = vsel %vm1243, %v1545, %v1546
      %v1548 = vrot.slane %v1419, 1
      %v1549 = vsel %vm1243, %v1546, %v1548
      %v1582 = vsel %vm1421, %v1143, %v1472
      %v1583 = vsel %vm1421, %v1144, %v1474
      %v1584 = vsel %vm1421, %v1146, %v1477
      %v1585 = vsel %vm1421, %v1147, %v1479
      %v1586 = vsel %vm1421, %v1149, %v1482
      %v1587 = vsel %vm1421, %v1150, %v1484
      %v1588 = vsel %vm1421, %v1152, %v1487
      %v1589 = vsel %vm1421, %v1153, %v1489
      %v1590 = vsel %vm1421, %v1155, %v1492
      %v1591 = vsel %vm1421, %v1156, %v1494
      %v1592 = vsel %vm1421, %v1158, %v1497
      %v1593 = vsel %vm1421, %v1159, %v1499
      %v1594 = vsel %vm1421, %v1161, %v1502
      %v1595 = vsel %vm1421, %v1162, %v1504
      %v1596 = vsel %vm1421, %v1164, %v1507
      %v1597 = vsel %vm1421, %v1165, %v1509
      %v1598 = vsel %vm1421, %v1167, %v1512
      %v1599 = vsel %vm1421, %v1168, %v1514
      %v1600 = vsel %vm1421, %v1170, %v1517
      %v1601 = vsel %vm1421, %v1171, %v1519
      %v1602 = vsel %vm1421, %v1173, %v1522
      %v1603 = vsel %vm1421, %v1174, %v1524
      %v1604 = vsel %vm1421, %v1176, %v1527
      %v1605 = vsel %vm1421, %v1177, %v1529
      %v1606 = vsel %vm1421, %v1179, %v1532
      %v1607 = vsel %vm1421, %v1180, %v1534
      %v1608 = vsel %vm1421, %v1182, %v1537
      %v1609 = vsel %vm1421, %v1183, %v1539
      %v1610 = vsel %vm1421, %v1185, %v1542
      %v1611 = vsel %vm1421, %v1186, %v1544
      %v1612 = vsel %vm1421, %v1188, %v1547
      %v1613 = vsel %vm1421, %v1189, %v1549
      %v1614 = vpack.c.bf16 %v1583, %v1582
      %v1615 = vpack.c.bf16 %v1585, %v1584
      %v1616 = vpack.c.bf16 %v1587, %v1586
      %v1617 = vpack.c.bf16 %v1589, %v1588
      %v1618 = vpack.c.bf16 %v1591, %v1590
      %v1619 = vpack.c.bf16 %v1593, %v1592
      %v1620 = vpack.c.bf16 %v1595, %v1594
      %v1621 = vpack.c.bf16 %v1597, %v1596
      %v1622 = vpack.c.bf16 %v1599, %v1598
      %v1623 = vpack.c.bf16 %v1601, %v1600
      %v1624 = vpack.c.bf16 %v1603, %v1602
      %v1625 = vpack.c.bf16 %v1605, %v1604
      %v1626 = vpack.c.bf16 %v1607, %v1606
      %v1627 = vpack.c.bf16 %v1609, %v1608
      %v1628 = vpack.c.bf16 %v1611, %v1610
      %v1629 = vpack.c.bf16 %v1613, %v1612
      %1630 = vst [vmem:[#allocation3] sm:$0xff] %v1614
      %1631 = vst [vmem:[#allocation3 + $0x18] sm:$0xff] %v1615
      %1632 = vst [vmem:[#allocation3 + $0x30] sm:$0xff] %v1616
      %1633 = vst [vmem:[#allocation3 + $0x48] sm:$0xff] %v1617
      %1634 = vst [vmem:[#allocation3 + $0x60] sm:$0xff] %v1618
      %1635 = vst [vmem:[#allocation3 + $0x78] sm:$0xff] %v1619
      %1636 = vst [vmem:[#allocation3 + $0x90] sm:$0xff] %v1620
      %1637 = vst [vmem:[#allocation3 + $0xa8] sm:$0xff] %v1621
      %1638 = vst [vmem:[#allocation3 + $0xc0] sm:$0xff] %v1622
      %1639 = vst [vmem:[#allocation3 + $0xd8] sm:$0xff] %v1623
      %1640 = vst [vmem:[#allocation3 + $0xf0] sm:$0xff] %v1624
      %1641 = vst [vmem:[#allocation3 + $0x108] sm:$0xff] %v1625
      %1642 = vst [vmem:[#allocation3 + $0x120] sm:$0xff] %v1626
      %1643 = vst [vmem:[#allocation3 + $0x138] sm:$0xff] %v1627
      %1644 = vst [vmem:[#allocation3 + $0x150] sm:$0xff] %v1628
      %1645 = vst [vmem:[#allocation3 + $0x168] sm:$0xff] %v1629
      %v1646 = vld [vmem:[%s1044] sm:$0xf]
      %v1647 = vld [vmem:[%s1044 + $0x4] sm:$0xf]
      %v1648 = vld [vmem:[%s1044 + $0x8] sm:$0xf]
      %v1649 = vld [vmem:[%s1044 + $0xc] sm:$0xf]
      %v1650 = vld [vmem:[%s1044 + $0x10] sm:$0xf]
      %v1651 = vld [vmem:[%s1044 + $0x14] sm:$0xf]
      %v1652 = vld [vmem:[%s1044 + $0x18] sm:$0xf]
      %v1653 = vld [vmem:[%s1044 + $0x1c] sm:$0xf]
      %v1654 = vld [vmem:[%s1044 + $0x20] sm:$0xf]
      %v1655 = vld [vmem:[%s1044 + $0x24] sm:$0xf]
      %v1656 = vld [vmem:[%s1044 + $0x28] sm:$0xf]
      %v1657 = vld [vmem:[%s1044 + $0x2c] sm:$0xf]
      %v1658 = vld [vmem:[%s1044 + $0x30] sm:$0xf]
      %v1659 = vld [vmem:[%s1044 + $0x34] sm:$0xf]
      %v1660 = vld [vmem:[%s1044 + $0x38] sm:$0xf]
      %v1661 = vld [vmem:[%s1044 + $0x3c] sm:$0xf]
      %v1662 = vld [vmem:[%s1044 + $0x40] sm:$0xf]
      %v1663 = vld [vmem:[%s1044 + $0x44] sm:$0xf]
      %v1664 = vld [vmem:[%s1044 + $0x48] sm:$0xf]
      %v1665 = vld [vmem:[%s1044 + $0x4c] sm:$0xf]
      %v1666 = vld [vmem:[%s1044 + $0x50] sm:$0xf]
      %v1667 = vld [vmem:[%s1044 + $0x54] sm:$0xf]
      %v1668 = vld [vmem:[%s1044 + $0x58] sm:$0xf]
      %v1669 = vld [vmem:[%s1044 + $0x5c] sm:$0xf]
      %v1670 = vld [vmem:[%s1044 + $0x60] sm:$0xf]
      %v1671 = vld [vmem:[%s1044 + $0x64] sm:$0xf]
      %v1672 = vld [vmem:[%s1044 + $0x68] sm:$0xf]
      %v1673 = vld [vmem:[%s1044 + $0x6c] sm:$0xf]
      %v1674 = vld [vmem:[%s1044 + $0x70] sm:$0xf]
      %v1675 = vld [vmem:[%s1044 + $0x74] sm:$0xf]
      %v1676 = vld [vmem:[%s1044 + $0x78] sm:$0xf]
      %v1677 = vld [vmem:[%s1044 + $0x7c] sm:$0xf]
      %v1678 = vld [vmem:[%s1044 + $0x80] sm:$0xf]
      %v1679 = vld [vmem:[%s1044 + $0x84] sm:$0xf]
      %v1680 = vld [vmem:[%s1044 + $0x88] sm:$0xf]
      %v1681 = vld [vmem:[%s1044 + $0x8c] sm:$0xf]
      %v1682 = vld [vmem:[%s1044 + $0x90] sm:$0xf]
      %v1683 = vld [vmem:[%s1044 + $0x94] sm:$0xf]
      %v1684 = vld [vmem:[%s1044 + $0x98] sm:$0xf]
      %v1685 = vld [vmem:[%s1044 + $0x9c] sm:$0xf]
      %v1686 = vld [vmem:[%s1044 + $0xa0] sm:$0xf]
      %v1687 = vld [vmem:[%s1044 + $0xa4] sm:$0xf]
      %v1688 = vld [vmem:[%s1044 + $0xa8] sm:$0xf]
      %v1689 = vld [vmem:[%s1044 + $0xac] sm:$0xf]
      %v1690 = vld [vmem:[%s1044 + $0xb0] sm:$0xf]
      %v1691 = vld [vmem:[%s1044 + $0xb4] sm:$0xf]
      %v1692 = vld [vmem:[%s1044 + $0xb8] sm:$0xf]
      %v1693 = vld [vmem:[%s1044 + $0xbc] sm:$0xf]
      %v1694 = vunpack.c.l.bf16 %v1646
      %v1695 = vunpack.c.l.bf16 %v1647
      %v1696 = vunpack.c.l.bf16 %v1648
      %v1697 = vunpack.c.l.bf16 %v1649
      %v1698 = vunpack.c.l.bf16 %v1650
      %v1699 = vunpack.c.l.bf16 %v1651
      %v1700 = vunpack.c.l.bf16 %v1652
      %v1701 = vunpack.c.l.bf16 %v1653
      %v1702 = vunpack.c.l.bf16 %v1654
      %v1703 = vunpack.c.l.bf16 %v1655
      %v1704 = vunpack.c.l.bf16 %v1656
      %v1705 = vunpack.c.l.bf16 %v1657
      %v1706 = vunpack.c.l.bf16 %v1658
      %v1707 = vunpack.c.l.bf16 %v1659
      %v1708 = vunpack.c.l.bf16 %v1660
      %v1709 = vunpack.c.l.bf16 %v1661
      %v1710 = vunpack.c.l.bf16 %v1662
      %v1711 = vunpack.c.l.bf16 %v1663
      %v1712 = vunpack.c.l.bf16 %v1664
      %v1713 = vunpack.c.l.bf16 %v1665
      %v1714 = vunpack.c.l.bf16 %v1666
      %v1715 = vunpack.c.l.bf16 %v1667
      %v1716 = vunpack.c.l.bf16 %v1668
      %v1717 = vunpack.c.l.bf16 %v1669
      %v1718 = vunpack.c.l.bf16 %v1670
      %v1719 = vunpack.c.l.bf16 %v1671
      %v1720 = vunpack.c.l.bf16 %v1672
      %v1721 = vunpack.c.l.bf16 %v1673
      %v1722 = vunpack.c.l.bf16 %v1674
      %v1723 = vunpack.c.l.bf16 %v1675
      %v1724 = vunpack.c.l.bf16 %v1676
      %v1725 = vunpack.c.l.bf16 %v1677
      %v1726 = vunpack.c.l.bf16 %v1678
      %v1727 = vunpack.c.l.bf16 %v1679
      %v1728 = vunpack.c.l.bf16 %v1680
      %v1729 = vunpack.c.l.bf16 %v1681
      %v1730 = vunpack.c.l.bf16 %v1682
      %v1731 = vunpack.c.l.bf16 %v1683
      %v1732 = vunpack.c.l.bf16 %v1684
      %v1733 = vunpack.c.l.bf16 %v1685
      %v1734 = vunpack.c.l.bf16 %v1686
      %v1735 = vunpack.c.l.bf16 %v1687
      %v1736 = vunpack.c.l.bf16 %v1688
      %v1737 = vunpack.c.l.bf16 %v1689
      %v1738 = vunpack.c.l.bf16 %v1690
      %v1739 = vunpack.c.l.bf16 %v1691
      %v1740 = vunpack.c.l.bf16 %v1692
      %v1741 = vunpack.c.l.bf16 %v1693
      %v1790 = vrot.slane %v1694, 1
      %v1791 = vrot.slane %v1695, 1
      %v1792 = vsel %vm1243, %v1790, %v1791
      %v1793 = vrot.slane %v1696, 1
      %v1794 = vsel %vm1243, %v1791, %v1793
      %v1795 = vrot.slane %v1697, 1
      %v1796 = vrot.slane %v1698, 1
      %v1797 = vsel %vm1243, %v1795, %v1796
      %v1798 = vrot.slane %v1699, 1
      %v1799 = vsel %vm1243, %v1796, %v1798
      %v1800 = vrot.slane %v1700, 1
      %v1801 = vrot.slane %v1701, 1
      %v1802 = vsel %vm1243, %v1800, %v1801
      %v1803 = vrot.slane %v1702, 1
      %v1804 = vsel %vm1243, %v1801, %v1803
      %v1805 = vrot.slane %v1703, 1
      %v1806 = vrot.slane %v1704, 1
      %v1807 = vsel %vm1243, %v1805, %v1806
      %v1808 = vrot.slane %v1705, 1
      %v1809 = vsel %vm1243, %v1806, %v1808
      %v1810 = vrot.slane %v1706, 1
      %v1811 = vrot.slane %v1707, 1
      %v1812 = vsel %vm1243, %v1810, %v1811
      %v1813 = vrot.slane %v1708, 1
      %v1814 = vsel %vm1243, %v1811, %v1813
      %v1815 = vrot.slane %v1709, 1
      %v1816 = vrot.slane %v1710, 1
      %v1817 = vsel %vm1243, %v1815, %v1816
      %v1818 = vrot.slane %v1711, 1
      %v1819 = vsel %vm1243, %v1816, %v1818
      %v1820 = vrot.slane %v1712, 1
      %v1821 = vrot.slane %v1713, 1
      %v1822 = vsel %vm1243, %v1820, %v1821
      %v1823 = vrot.slane %v1714, 1
      %v1824 = vsel %vm1243, %v1821, %v1823
      %v1825 = vrot.slane %v1715, 1
      %v1826 = vrot.slane %v1716, 1
      %v1827 = vsel %vm1243, %v1825, %v1826
      %v1828 = vrot.slane %v1717, 1
      %v1829 = vsel %vm1243, %v1826, %v1828
      %v1830 = vrot.slane %v1718, 1
      %v1831 = vrot.slane %v1719, 1
      %v1832 = vsel %vm1243, %v1830, %v1831
      %v1833 = vrot.slane %v1720, 1
      %v1834 = vsel %vm1243, %v1831, %v1833
      %v1835 = vrot.slane %v1721, 1
      %v1836 = vrot.slane %v1722, 1
      %v1837 = vsel %vm1243, %v1835, %v1836
      %v1838 = vrot.slane %v1723, 1
      %v1839 = vsel %vm1243, %v1836, %v1838
      %v1840 = vrot.slane %v1724, 1
      %v1841 = vrot.slane %v1725, 1
      %v1842 = vsel %vm1243, %v1840, %v1841
      %v1843 = vrot.slane %v1726, 1
      %v1844 = vsel %vm1243, %v1841, %v1843
      %v1845 = vrot.slane %v1727, 1
      %v1846 = vrot.slane %v1728, 1
      %v1847 = vsel %vm1243, %v1845, %v1846
      %v1848 = vrot.slane %v1729, 1
      %v1849 = vsel %vm1243, %v1846, %v1848
      %v1850 = vrot.slane %v1730, 1
      %v1851 = vrot.slane %v1731, 1
      %v1852 = vsel %vm1243, %v1850, %v1851
      %v1853 = vrot.slane %v1732, 1
      %v1854 = vsel %vm1243, %v1851, %v1853
      %v1855 = vrot.slane %v1733, 1
      %v1856 = vrot.slane %v1734, 1
      %v1857 = vsel %vm1243, %v1855, %v1856
      %v1858 = vrot.slane %v1735, 1
      %v1859 = vsel %vm1243, %v1856, %v1858
      %v1860 = vrot.slane %v1736, 1
      %v1861 = vrot.slane %v1737, 1
      %v1862 = vsel %vm1243, %v1860, %v1861
      %v1863 = vrot.slane %v1738, 1
      %v1864 = vsel %vm1243, %v1861, %v1863
      %v1865 = vrot.slane %v1739, 1
      %v1866 = vrot.slane %v1740, 1
      %v1867 = vsel %vm1243, %v1865, %v1866
      %v1868 = vrot.slane %v1741, 1
      %v1869 = vsel %vm1243, %v1866, %v1868
      %v1918 = vsel %vm1194, %v1694, %v1792
      %v1919 = vsel %vm1194, %v1695, %v1794
      %v1920 = vsel %vm1194, %v1696, %v1793
      %v1921 = vsel %vm1194, %v1697, %v1797
      %v1922 = vsel %vm1194, %v1698, %v1799
      %v1923 = vsel %vm1194, %v1699, %v1798
      %v1924 = vsel %vm1194, %v1700, %v1802
      %v1925 = vsel %vm1194, %v1701, %v1804
      %v1926 = vsel %vm1194, %v1702, %v1803
      %v1927 = vsel %vm1194, %v1703, %v1807
      %v1928 = vsel %vm1194, %v1704, %v1809
      %v1929 = vsel %vm1194, %v1705, %v1808
      %v1930 = vsel %vm1194, %v1706, %v1812
      %v1931 = vsel %vm1194, %v1707, %v1814
      %v1932 = vsel %vm1194, %v1708, %v1813
      %v1933 = vsel %vm1194, %v1709, %v1817
      %v1934 = vsel %vm1194, %v1710, %v1819
      %v1935 = vsel %vm1194, %v1711, %v1818
      %v1936 = vsel %vm1194, %v1712, %v1822
      %v1937 = vsel %vm1194, %v1713, %v1824
      %v1938 = vsel %vm1194, %v1714, %v1823
      %v1939 = vsel %vm1194, %v1715, %v1827
      %v1940 = vsel %vm1194, %v1716, %v1829
      %v1941 = vsel %vm1194, %v1717, %v1828
      %v1942 = vsel %vm1194, %v1718, %v1832
      %v1943 = vsel %vm1194, %v1719, %v1834
      %v1944 = vsel %vm1194, %v1720, %v1833
      %v1945 = vsel %vm1194, %v1721, %v1837
      %v1946 = vsel %vm1194, %v1722, %v1839
      %v1947 = vsel %vm1194, %v1723, %v1838
      %v1948 = vsel %vm1194, %v1724, %v1842
      %v1949 = vsel %vm1194, %v1725, %v1844
      %v1950 = vsel %vm1194, %v1726, %v1843
      %v1951 = vsel %vm1194, %v1727, %v1847
      %v1952 = vsel %vm1194, %v1728, %v1849
      %v1953 = vsel %vm1194, %v1729, %v1848
      %v1954 = vsel %vm1194, %v1730, %v1852
      %v1955 = vsel %vm1194, %v1731, %v1854
      %v1956 = vsel %vm1194, %v1732, %v1853
      %v1957 = vsel %vm1194, %v1733, %v1857
      %v1958 = vsel %vm1194, %v1734, %v1859
      %v1959 = vsel %vm1194, %v1735, %v1858
      %v1960 = vsel %vm1194, %v1736, %v1862
      %v1961 = vsel %vm1194, %v1737, %v1864
      %v1962 = vsel %vm1194, %v1738, %v1863
      %v1963 = vsel %vm1194, %v1739, %v1867
      %v1964 = vsel %vm1194, %v1740, %v1869
      %v1965 = vsel %vm1194, %v1741, %v1868
      %v2014 = vrot.slane %v1918, 1
      %v2015 = vrot.slane %v1919, 1
      %v2016 = vsel %vm1243, %v2014, %v2015
      %v2017 = vrot.slane %v1920, 1
      %v2018 = vsel %vm1243, %v2015, %v2017
      %v2019 = vrot.slane %v1921, 1
      %v2020 = vrot.slane %v1922, 1
      %v2021 = vsel %vm1243, %v2019, %v2020
      %v2022 = vrot.slane %v1923, 1
      %v2023 = vsel %vm1243, %v2020, %v2022
      %v2024 = vrot.slane %v1924, 1
      %v2025 = vrot.slane %v1925, 1
      %v2026 = vsel %vm1243, %v2024, %v2025
      %v2027 = vrot.slane %v1926, 1
      %v2028 = vsel %vm1243, %v2025, %v2027
      %v2029 = vrot.slane %v1927, 1
      %v2030 = vrot.slane %v1928, 1
      %v2031 = vsel %vm1243, %v2029, %v2030
      %v2032 = vrot.slane %v1929, 1
      %v2033 = vsel %vm1243, %v2030, %v2032
      %v2034 = vrot.slane %v1930, 1
      %v2035 = vrot.slane %v1931, 1
      %v2036 = vsel %vm1243, %v2034, %v2035
      %v2037 = vrot.slane %v1932, 1
      %v2038 = vsel %vm1243, %v2035, %v2037
      %v2039 = vrot.slane %v1933, 1
      %v2040 = vrot.slane %v1934, 1
      %v2041 = vsel %vm1243, %v2039, %v2040
      %v2042 = vrot.slane %v1935, 1
      %v2043 = vsel %vm1243, %v2040, %v2042
      %v2044 = vrot.slane %v1936, 1
      %v2045 = vrot.slane %v1937, 1
      %v2046 = vsel %vm1243, %v2044, %v2045
      %v2047 = vrot.slane %v1938, 1
      %v2048 = vsel %vm1243, %v2045, %v2047
      %v2049 = vrot.slane %v1939, 1
      %v2050 = vrot.slane %v1940, 1
      %v2051 = vsel %vm1243, %v2049, %v2050
      %v2052 = vrot.slane %v1941, 1
      %v2053 = vsel %vm1243, %v2050, %v2052
      %v2054 = vrot.slane %v1942, 1
      %v2055 = vrot.slane %v1943, 1
      %v2056 = vsel %vm1243, %v2054, %v2055
      %v2057 = vrot.slane %v1944, 1
      %v2058 = vsel %vm1243, %v2055, %v2057
      %v2059 = vrot.slane %v1945, 1
      %v2060 = vrot.slane %v1946, 1
      %v2061 = vsel %vm1243, %v2059, %v2060
      %v2062 = vrot.slane %v1947, 1
      %v2063 = vsel %vm1243, %v2060, %v2062
      %v2064 = vrot.slane %v1948, 1
      %v2065 = vrot.slane %v1949, 1
      %v2066 = vsel %vm1243, %v2064, %v2065
      %v2067 = vrot.slane %v1950, 1
      %v2068 = vsel %vm1243, %v2065, %v2067
      %v2069 = vrot.slane %v1951, 1
      %v2070 = vrot.slane %v1952, 1
      %v2071 = vsel %vm1243, %v2069, %v2070
      %v2072 = vrot.slane %v1953, 1
      %v2073 = vsel %vm1243, %v2070, %v2072
      %v2074 = vrot.slane %v1954, 1
      %v2075 = vrot.slane %v1955, 1
      %v2076 = vsel %vm1243, %v2074, %v2075
      %v2077 = vrot.slane %v1956, 1
      %v2078 = vsel %vm1243, %v2075, %v2077
      %v2079 = vrot.slane %v1957, 1
      %v2080 = vrot.slane %v1958, 1
      %v2081 = vsel %vm1243, %v2079, %v2080
      %v2082 = vrot.slane %v1959, 1
      %v2083 = vsel %vm1243, %v2080, %v2082
      %v2084 = vrot.slane %v1960, 1
      %v2085 = vrot.slane %v1961, 1
      %v2086 = vsel %vm1243, %v2084, %v2085
      %v2087 = vrot.slane %v1962, 1
      %v2088 = vsel %vm1243, %v2085, %v2087
      %v2089 = vrot.slane %v1963, 1
      %v2090 = vrot.slane %v1964, 1
      %v2091 = vsel %vm1243, %v2089, %v2090
      %v2092 = vrot.slane %v1965, 1
      %v2093 = vsel %vm1243, %v2090, %v2092
      %v2126 = vsel %vm1421, %v1694, %v2016
      %v2127 = vsel %vm1421, %v1695, %v2018
      %v2128 = vsel %vm1421, %v1697, %v2021
      %v2129 = vsel %vm1421, %v1698, %v2023
      %v2130 = vsel %vm1421, %v1700, %v2026
      %v2131 = vsel %vm1421, %v1701, %v2028
      %v2132 = vsel %vm1421, %v1703, %v2031
      %v2133 = vsel %vm1421, %v1704, %v2033
      %v2134 = vsel %vm1421, %v1706, %v2036
      %v2135 = vsel %vm1421, %v1707, %v2038
      %v2136 = vsel %vm1421, %v1709, %v2041
      %v2137 = vsel %vm1421, %v1710, %v2043
      %v2138 = vsel %vm1421, %v1712, %v2046
      %v2139 = vsel %vm1421, %v1713, %v2048
      %v2140 = vsel %vm1421, %v1715, %v2051
      %v2141 = vsel %vm1421, %v1716, %v2053
      %v2142 = vsel %vm1421, %v1718, %v2056
      %v2143 = vsel %vm1421, %v1719, %v2058
      %v2144 = vsel %vm1421, %v1721, %v2061
      %v2145 = vsel %vm1421, %v1722, %v2063
      %v2146 = vsel %vm1421, %v1724, %v2066
      %v2147 = vsel %vm1421, %v1725, %v2068
      %v2148 = vsel %vm1421, %v1727, %v2071
      %v2149 = vsel %vm1421, %v1728, %v2073
      %v2150 = vsel %vm1421, %v1730, %v2076
      %v2151 = vsel %vm1421, %v1731, %v2078
      %v2152 = vsel %vm1421, %v1733, %v2081
      %v2153 = vsel %vm1421, %v1734, %v2083
      %v2154 = vsel %vm1421, %v1736, %v2086
      %v2155 = vsel %vm1421, %v1737, %v2088
      %v2156 = vsel %vm1421, %v1739, %v2091
      %v2157 = vsel %vm1421, %v1740, %v2093
      %v2158 = vpack.c.bf16 %v2127, %v2126
      %v2159 = vpack.c.bf16 %v2129, %v2128
      %v2160 = vpack.c.bf16 %v2131, %v2130
      %v2161 = vpack.c.bf16 %v2133, %v2132
      %v2162 = vpack.c.bf16 %v2135, %v2134
      %v2163 = vpack.c.bf16 %v2137, %v2136
      %v2164 = vpack.c.bf16 %v2139, %v2138
      %v2165 = vpack.c.bf16 %v2141, %v2140
      %v2166 = vpack.c.bf16 %v2143, %v2142
      %v2167 = vpack.c.bf16 %v2145, %v2144
      %v2168 = vpack.c.bf16 %v2147, %v2146
      %v2169 = vpack.c.bf16 %v2149, %v2148
      %v2170 = vpack.c.bf16 %v2151, %v2150
      %v2171 = vpack.c.bf16 %v2153, %v2152
      %v2172 = vpack.c.bf16 %v2155, %v2154
      %v2173 = vpack.c.bf16 %v2157, %v2156
      %2174 = vst [vmem:[#allocation3 + $0x8] sm:$0xff] %v2158
      %2175 = vst [vmem:[#allocation3 + $0x20] sm:$0xff] %v2159
      %2176 = vst [vmem:[#allocation3 + $0x38] sm:$0xff] %v2160
      %2177 = vst [vmem:[#allocation3 + $0x50] sm:$0xff] %v2161
      %2178 = vst [vmem:[#allocation3 + $0x68] sm:$0xff] %v2162
      %2179 = vst [vmem:[#allocation3 + $0x80] sm:$0xff] %v2163
      %2180 = vst [vmem:[#allocation3 + $0x98] sm:$0xff] %v2164
      %2181 = vst [vmem:[#allocation3 + $0xb0] sm:$0xff] %v2165
      %2182 = vst [vmem:[#allocation3 + $0xc8] sm:$0xff] %v2166
      %2183 = vst [vmem:[#allocation3 + $0xe0] sm:$0xff] %v2167
      %2184 = vst [vmem:[#allocation3 + $0xf8] sm:$0xff] %v2168
      %2185 = vst [vmem:[#allocation3 + $0x110] sm:$0xff] %v2169
      %2186 = vst [vmem:[#allocation3 + $0x128] sm:$0xff] %v2170
      %2187 = vst [vmem:[#allocation3 + $0x140] sm:$0xff] %v2171
      %2188 = vst [vmem:[#allocation3 + $0x158] sm:$0xff] %v2172
      %2189 = vst [vmem:[#allocation3 + $0x170] sm:$0xff] %v2173
      %s2190 = scalar_lea.vmem [#allocation2], 24
      %v2191 = vld [vmem:[%s2190] sm:$0xf]
      %v2192 = vld [vmem:[%s2190 + $0x4] sm:$0xf]
      %v2193 = vld [vmem:[%s2190 + $0x8] sm:$0xf]
      %v2194 = vld [vmem:[%s2190 + $0xc] sm:$0xf]
      %v2195 = vld [vmem:[%s2190 + $0x10] sm:$0xf]
      %v2196 = vld [vmem:[%s2190 + $0x14] sm:$0xf]
      %v2197 = vld [vmem:[%s2190 + $0x18] sm:$0xf]
      %v2198 = vld [vmem:[%s2190 + $0x1c] sm:$0xf]
      %v2199 = vld [vmem:[%s2190 + $0x20] sm:$0xf]
      %v2200 = vld [vmem:[%s2190 + $0x24] sm:$0xf]
      %v2201 = vld [vmem:[%s2190 + $0x28] sm:$0xf]
      %v2202 = vld [vmem:[%s2190 + $0x2c] sm:$0xf]
      %v2203 = vld [vmem:[%s2190 + $0x30] sm:$0xf]
      %v2204 = vld [vmem:[%s2190 + $0x34] sm:$0xf]
      %v2205 = vld [vmem:[%s2190 + $0x38] sm:$0xf]
      %v2206 = vld [vmem:[%s2190 + $0x3c] sm:$0xf]
      %v2207 = vld [vmem:[%s2190 + $0x40] sm:$0xf]
      %v2208 = vld [vmem:[%s2190 + $0x44] sm:$0xf]
      %v2209 = vld [vmem:[%s2190 + $0x48] sm:$0xf]
      %v2210 = vld [vmem:[%s2190 + $0x4c] sm:$0xf]
      %v2211 = vld [vmem:[%s2190 + $0x50] sm:$0xf]
      %v2212 = vld [vmem:[%s2190 + $0x54] sm:$0xf]
      %v2213 = vld [vmem:[%s2190 + $0x58] sm:$0xf]
      %v2214 = vld [vmem:[%s2190 + $0x5c] sm:$0xf]
      %v2215 = vld [vmem:[%s2190 + $0x60] sm:$0xf]
      %v2216 = vld [vmem:[%s2190 + $0x64] sm:$0xf]
      %v2217 = vld [vmem:[%s2190 + $0x68] sm:$0xf]
      %v2218 = vld [vmem:[%s2190 + $0x6c] sm:$0xf]
      %v2219 = vld [vmem:[%s2190 + $0x70] sm:$0xf]
      %v2220 = vld [vmem:[%s2190 + $0x74] sm:$0xf]
      %v2221 = vld [vmem:[%s2190 + $0x78] sm:$0xf]
      %v2222 = vld [vmem:[%s2190 + $0x7c] sm:$0xf]
      %v2223 = vld [vmem:[%s2190 + $0x80] sm:$0xf]
      %v2224 = vld [vmem:[%s2190 + $0x84] sm:$0xf]
      %v2225 = vld [vmem:[%s2190 + $0x88] sm:$0xf]
      %v2226 = vld [vmem:[%s2190 + $0x8c] sm:$0xf]
      %v2227 = vld [vmem:[%s2190 + $0x90] sm:$0xf]
      %v2228 = vld [vmem:[%s2190 + $0x94] sm:$0xf]
      %v2229 = vld [vmem:[%s2190 + $0x98] sm:$0xf]
      %v2230 = vld [vmem:[%s2190 + $0x9c] sm:$0xf]
      %v2231 = vld [vmem:[%s2190 + $0xa0] sm:$0xf]
      %v2232 = vld [vmem:[%s2190 + $0xa4] sm:$0xf]
      %v2233 = vld [vmem:[%s2190 + $0xa8] sm:$0xf]
      %v2234 = vld [vmem:[%s2190 + $0xac] sm:$0xf]
      %v2235 = vld [vmem:[%s2190 + $0xb0] sm:$0xf]
      %v2236 = vld [vmem:[%s2190 + $0xb4] sm:$0xf]
      %v2237 = vld [vmem:[%s2190 + $0xb8] sm:$0xf]
      %v2238 = vld [vmem:[%s2190 + $0xbc] sm:$0xf]
      %v2239 = vunpack.c.l.bf16 %v2191
      %v2240 = vunpack.c.l.bf16 %v2192
      %v2241 = vunpack.c.l.bf16 %v2193
      %v2242 = vunpack.c.l.bf16 %v2194
      %v2243 = vunpack.c.l.bf16 %v2195
      %v2244 = vunpack.c.l.bf16 %v2196
      %v2245 = vunpack.c.l.bf16 %v2197
      %v2246 = vunpack.c.l.bf16 %v2198
      %v2247 = vunpack.c.l.bf16 %v2199
      %v2248 = vunpack.c.l.bf16 %v2200
      %v2249 = vunpack.c.l.bf16 %v2201
      %v2250 = vunpack.c.l.bf16 %v2202
      %v2251 = vunpack.c.l.bf16 %v2203
      %v2252 = vunpack.c.l.bf16 %v2204
      %v2253 = vunpack.c.l.bf16 %v2205
      %v2254 = vunpack.c.l.bf16 %v2206
      %v2255 = vunpack.c.l.bf16 %v2207
      %v2256 = vunpack.c.l.bf16 %v2208
      %v2257 = vunpack.c.l.bf16 %v2209
      %v2258 = vunpack.c.l.bf16 %v2210
      %v2259 = vunpack.c.l.bf16 %v2211
      %v2260 = vunpack.c.l.bf16 %v2212
      %v2261 = vunpack.c.l.bf16 %v2213
      %v2262 = vunpack.c.l.bf16 %v2214
      %v2263 = vunpack.c.l.bf16 %v2215
      %v2264 = vunpack.c.l.bf16 %v2216
      %v2265 = vunpack.c.l.bf16 %v2217
      %v2266 = vunpack.c.l.bf16 %v2218
      %v2267 = vunpack.c.l.bf16 %v2219
      %v2268 = vunpack.c.l.bf16 %v2220
      %v2269 = vunpack.c.l.bf16 %v2221
      %v2270 = vunpack.c.l.bf16 %v2222
      %v2271 = vunpack.c.l.bf16 %v2223
      %v2272 = vunpack.c.l.bf16 %v2224
      %v2273 = vunpack.c.l.bf16 %v2225
      %v2274 = vunpack.c.l.bf16 %v2226
      %v2275 = vunpack.c.l.bf16 %v2227
      %v2276 = vunpack.c.l.bf16 %v2228
      %v2277 = vunpack.c.l.bf16 %v2229
      %v2278 = vunpack.c.l.bf16 %v2230
      %v2279 = vunpack.c.l.bf16 %v2231
      %v2280 = vunpack.c.l.bf16 %v2232
      %v2281 = vunpack.c.l.bf16 %v2233
      %v2282 = vunpack.c.l.bf16 %v2234
      %v2283 = vunpack.c.l.bf16 %v2235
      %v2284 = vunpack.c.l.bf16 %v2236
      %v2285 = vunpack.c.l.bf16 %v2237
      %v2286 = vunpack.c.l.bf16 %v2238
      %v2335 = vrot.slane %v2239, 1
      %v2336 = vrot.slane %v2240, 1
      %v2337 = vsel %vm1243, %v2335, %v2336
      %v2338 = vrot.slane %v2241, 1
      %v2339 = vsel %vm1243, %v2336, %v2338
      %v2340 = vrot.slane %v2242, 1
      %v2341 = vrot.slane %v2243, 1
      %v2342 = vsel %vm1243, %v2340, %v2341
      %v2343 = vrot.slane %v2244, 1
      %v2344 = vsel %vm1243, %v2341, %v2343
      %v2345 = vrot.slane %v2245, 1
      %v2346 = vrot.slane %v2246, 1
      %v2347 = vsel %vm1243, %v2345, %v2346
      %v2348 = vrot.slane %v2247, 1
      %v2349 = vsel %vm1243, %v2346, %v2348
      %v2350 = vrot.slane %v2248, 1
      %v2351 = vrot.slane %v2249, 1
      %v2352 = vsel %vm1243, %v2350, %v2351
      %v2353 = vrot.slane %v2250, 1
      %v2354 = vsel %vm1243, %v2351, %v2353
      %v2355 = vrot.slane %v2251, 1
      %v2356 = vrot.slane %v2252, 1
      %v2357 = vsel %vm1243, %v2355, %v2356
      %v2358 = vrot.slane %v2253, 1
      %v2359 = vsel %vm1243, %v2356, %v2358
      %v2360 = vrot.slane %v2254, 1
      %v2361 = vrot.slane %v2255, 1
      %v2362 = vsel %vm1243, %v2360, %v2361
      %v2363 = vrot.slane %v2256, 1
      %v2364 = vsel %vm1243, %v2361, %v2363
      %v2365 = vrot.slane %v2257, 1
      %v2366 = vrot.slane %v2258, 1
      %v2367 = vsel %vm1243, %v2365, %v2366
      %v2368 = vrot.slane %v2259, 1
      %v2369 = vsel %vm1243, %v2366, %v2368
      %v2370 = vrot.slane %v2260, 1
      %v2371 = vrot.slane %v2261, 1
      %v2372 = vsel %vm1243, %v2370, %v2371
      %v2373 = vrot.slane %v2262, 1
      %v2374 = vsel %vm1243, %v2371, %v2373
      %v2375 = vrot.slane %v2263, 1
      %v2376 = vrot.slane %v2264, 1
      %v2377 = vsel %vm1243, %v2375, %v2376
      %v2378 = vrot.slane %v2265, 1
      %v2379 = vsel %vm1243, %v2376, %v2378
      %v2380 = vrot.slane %v2266, 1
      %v2381 = vrot.slane %v2267, 1
      %v2382 = vsel %vm1243, %v2380, %v2381
      %v2383 = vrot.slane %v2268, 1
      %v2384 = vsel %vm1243, %v2381, %v2383
      %v2385 = vrot.slane %v2269, 1
      %v2386 = vrot.slane %v2270, 1
      %v2387 = vsel %vm1243, %v2385, %v2386
      %v2388 = vrot.slane %v2271, 1
      %v2389 = vsel %vm1243, %v2386, %v2388
      %v2390 = vrot.slane %v2272, 1
      %v2391 = vrot.slane %v2273, 1
      %v2392 = vsel %vm1243, %v2390, %v2391
      %v2393 = vrot.slane %v2274, 1
      %v2394 = vsel %vm1243, %v2391, %v2393
      %v2395 = vrot.slane %v2275, 1
      %v2396 = vrot.slane %v2276, 1
      %v2397 = vsel %vm1243, %v2395, %v2396
      %v2398 = vrot.slane %v2277, 1
      %v2399 = vsel %vm1243, %v2396, %v2398
      %v2400 = vrot.slane %v2278, 1
      %v2401 = vrot.slane %v2279, 1
      %v2402 = vsel %vm1243, %v2400, %v2401
      %v2403 = vrot.slane %v2280, 1
      %v2404 = vsel %vm1243, %v2401, %v2403
      %v2405 = vrot.slane %v2281, 1
      %v2406 = vrot.slane %v2282, 1
      %v2407 = vsel %vm1243, %v2405, %v2406
      %v2408 = vrot.slane %v2283, 1
      %v2409 = vsel %vm1243, %v2406, %v2408
      %v2410 = vrot.slane %v2284, 1
      %v2411 = vrot.slane %v2285, 1
      %v2412 = vsel %vm1243, %v2410, %v2411
      %v2413 = vrot.slane %v2286, 1
      %v2414 = vsel %vm1243, %v2411, %v2413
      %v2463 = vsel %vm1194, %v2239, %v2337
      %v2464 = vsel %vm1194, %v2240, %v2339
      %v2465 = vsel %vm1194, %v2241, %v2338
      %v2466 = vsel %vm1194, %v2242, %v2342
      %v2467 = vsel %vm1194, %v2243, %v2344
      %v2468 = vsel %vm1194, %v2244, %v2343
      %v2469 = vsel %vm1194, %v2245, %v2347
      %v2470 = vsel %vm1194, %v2246, %v2349
      %v2471 = vsel %vm1194, %v2247, %v2348
      %v2472 = vsel %vm1194, %v2248, %v2352
      %v2473 = vsel %vm1194, %v2249, %v2354
      %v2474 = vsel %vm1194, %v2250, %v2353
      %v2475 = vsel %vm1194, %v2251, %v2357
      %v2476 = vsel %vm1194, %v2252, %v2359
      %v2477 = vsel %vm1194, %v2253, %v2358
      %v2478 = vsel %vm1194, %v2254, %v2362
      %v2479 = vsel %vm1194, %v2255, %v2364
      %v2480 = vsel %vm1194, %v2256, %v2363
      %v2481 = vsel %vm1194, %v2257, %v2367
      %v2482 = vsel %vm1194, %v2258, %v2369
      %v2483 = vsel %vm1194, %v2259, %v2368
      %v2484 = vsel %vm1194, %v2260, %v2372
      %v2485 = vsel %vm1194, %v2261, %v2374
      %v2486 = vsel %vm1194, %v2262, %v2373
      %v2487 = vsel %vm1194, %v2263, %v2377
      %v2488 = vsel %vm1194, %v2264, %v2379
      %v2489 = vsel %vm1194, %v2265, %v2378
      %v2490 = vsel %vm1194, %v2266, %v2382
      %v2491 = vsel %vm1194, %v2267, %v2384
      %v2492 = vsel %vm1194, %v2268, %v2383
      %v2493 = vsel %vm1194, %v2269, %v2387
      %v2494 = vsel %vm1194, %v2270, %v2389
      %v2495 = vsel %vm1194, %v2271, %v2388
      %v2496 = vsel %vm1194, %v2272, %v2392
      %v2497 = vsel %vm1194, %v2273, %v2394
      %v2498 = vsel %vm1194, %v2274, %v2393
      %v2499 = vsel %vm1194, %v2275, %v2397
      %v2500 = vsel %vm1194, %v2276, %v2399
      %v2501 = vsel %vm1194, %v2277, %v2398
      %v2502 = vsel %vm1194, %v2278, %v2402
      %v2503 = vsel %vm1194, %v2279, %v2404
      %v2504 = vsel %vm1194, %v2280, %v2403
      %v2505 = vsel %vm1194, %v2281, %v2407
      %v2506 = vsel %vm1194, %v2282, %v2409
      %v2507 = vsel %vm1194, %v2283, %v2408
      %v2508 = vsel %vm1194, %v2284, %v2412
      %v2509 = vsel %vm1194, %v2285, %v2414
      %v2510 = vsel %vm1194, %v2286, %v2413
      %v2559 = vrot.slane %v2463, 1
      %v2560 = vrot.slane %v2464, 1
      %v2561 = vsel %vm1243, %v2559, %v2560
      %v2562 = vrot.slane %v2465, 1
      %v2563 = vsel %vm1243, %v2560, %v2562
      %v2564 = vrot.slane %v2466, 1
      %v2565 = vrot.slane %v2467, 1
      %v2566 = vsel %vm1243, %v2564, %v2565
      %v2567 = vrot.slane %v2468, 1
      %v2568 = vsel %vm1243, %v2565, %v2567
      %v2569 = vrot.slane %v2469, 1
      %v2570 = vrot.slane %v2470, 1
      %v2571 = vsel %vm1243, %v2569, %v2570
      %v2572 = vrot.slane %v2471, 1
      %v2573 = vsel %vm1243, %v2570, %v2572
      %v2574 = vrot.slane %v2472, 1
      %v2575 = vrot.slane %v2473, 1
      %v2576 = vsel %vm1243, %v2574, %v2575
      %v2577 = vrot.slane %v2474, 1
      %v2578 = vsel %vm1243, %v2575, %v2577
      %v2579 = vrot.slane %v2475, 1
      %v2580 = vrot.slane %v2476, 1
      %v2581 = vsel %vm1243, %v2579, %v2580
      %v2582 = vrot.slane %v2477, 1
      %v2583 = vsel %vm1243, %v2580, %v2582
      %v2584 = vrot.slane %v2478, 1
      %v2585 = vrot.slane %v2479, 1
      %v2586 = vsel %vm1243, %v2584, %v2585
      %v2587 = vrot.slane %v2480, 1
      %v2588 = vsel %vm1243, %v2585, %v2587
      %v2589 = vrot.slane %v2481, 1
      %v2590 = vrot.slane %v2482, 1
      %v2591 = vsel %vm1243, %v2589, %v2590
      %v2592 = vrot.slane %v2483, 1
      %v2593 = vsel %vm1243, %v2590, %v2592
      %v2594 = vrot.slane %v2484, 1
      %v2595 = vrot.slane %v2485, 1
      %v2596 = vsel %vm1243, %v2594, %v2595
      %v2597 = vrot.slane %v2486, 1
      %v2598 = vsel %vm1243, %v2595, %v2597
      %v2599 = vrot.slane %v2487, 1
      %v2600 = vrot.slane %v2488, 1
      %v2601 = vsel %vm1243, %v2599, %v2600
      %v2602 = vrot.slane %v2489, 1
      %v2603 = vsel %vm1243, %v2600, %v2602
      %v2604 = vrot.slane %v2490, 1
      %v2605 = vrot.slane %v2491, 1
      %v2606 = vsel %vm1243, %v2604, %v2605
      %v2607 = vrot.slane %v2492, 1
      %v2608 = vsel %vm1243, %v2605, %v2607
      %v2609 = vrot.slane %v2493, 1
      %v2610 = vrot.slane %v2494, 1
      %v2611 = vsel %vm1243, %v2609, %v2610
      %v2612 = vrot.slane %v2495, 1
      %v2613 = vsel %vm1243, %v2610, %v2612
      %v2614 = vrot.slane %v2496, 1
      %v2615 = vrot.slane %v2497, 1
      %v2616 = vsel %vm1243, %v2614, %v2615
      %v2617 = vrot.slane %v2498, 1
      %v2618 = vsel %vm1243, %v2615, %v2617
      %v2619 = vrot.slane %v2499, 1
      %v2620 = vrot.slane %v2500, 1
      %v2621 = vsel %vm1243, %v2619, %v2620
      %v2622 = vrot.slane %v2501, 1
      %v2623 = vsel %vm1243, %v2620, %v2622
      %v2624 = vrot.slane %v2502, 1
      %v2625 = vrot.slane %v2503, 1
      %v2626 = vsel %vm1243, %v2624, %v2625
      %v2627 = vrot.slane %v2504, 1
      %v2628 = vsel %vm1243, %v2625, %v2627
      %v2629 = vrot.slane %v2505, 1
      %v2630 = vrot.slane %v2506, 1
      %v2631 = vsel %vm1243, %v2629, %v2630
      %v2632 = vrot.slane %v2507, 1
      %v2633 = vsel %vm1243, %v2630, %v2632
      %v2634 = vrot.slane %v2508, 1
      %v2635 = vrot.slane %v2509, 1
      %v2636 = vsel %vm1243, %v2634, %v2635
      %v2637 = vrot.slane %v2510, 1
      %v2638 = vsel %vm1243, %v2635, %v2637
      %v2671 = vsel %vm1421, %v2239, %v2561
      %v2672 = vsel %vm1421, %v2240, %v2563
      %v2673 = vsel %vm1421, %v2242, %v2566
      %v2674 = vsel %vm1421, %v2243, %v2568
      %v2675 = vsel %vm1421, %v2245, %v2571
      %v2676 = vsel %vm1421, %v2246, %v2573
      %v2677 = vsel %vm1421, %v2248, %v2576
      %v2678 = vsel %vm1421, %v2249, %v2578
      %v2679 = vsel %vm1421, %v2251, %v2581
      %v2680 = vsel %vm1421, %v2252, %v2583
      %v2681 = vsel %vm1421, %v2254, %v2586
      %v2682 = vsel %vm1421, %v2255, %v2588
      %v2683 = vsel %vm1421, %v2257, %v2591
      %v2684 = vsel %vm1421, %v2258, %v2593
      %v2685 = vsel %vm1421, %v2260, %v2596
      %v2686 = vsel %vm1421, %v2261, %v2598
      %v2687 = vsel %vm1421, %v2263, %v2601
      %v2688 = vsel %vm1421, %v2264, %v2603
      %v2689 = vsel %vm1421, %v2266, %v2606
      %v2690 = vsel %vm1421, %v2267, %v2608
      %v2691 = vsel %vm1421, %v2269, %v2611
      %v2692 = vsel %vm1421, %v2270, %v2613
      %v2693 = vsel %vm1421, %v2272, %v2616
      %v2694 = vsel %vm1421, %v2273, %v2618
      %v2695 = vsel %vm1421, %v2275, %v2621
      %v2696 = vsel %vm1421, %v2276, %v2623
      %v2697 = vsel %vm1421, %v2278, %v2626
      %v2698 = vsel %vm1421, %v2279, %v2628
      %v2699 = vsel %vm1421, %v2281, %v2631
      %v2700 = vsel %vm1421, %v2282, %v2633
      %v2701 = vsel %vm1421, %v2284, %v2636
      %v2702 = vsel %vm1421, %v2285, %v2638
      %v2703 = vpack.c.bf16 %v2672, %v2671
      %v2704 = vpack.c.bf16 %v2674, %v2673
      %v2705 = vpack.c.bf16 %v2676, %v2675
      %v2706 = vpack.c.bf16 %v2678, %v2677
      %v2707 = vpack.c.bf16 %v2680, %v2679
      %v2708 = vpack.c.bf16 %v2682, %v2681
      %v2709 = vpack.c.bf16 %v2684, %v2683
      %v2710 = vpack.c.bf16 %v2686, %v2685
      %v2711 = vpack.c.bf16 %v2688, %v2687
      %v2712 = vpack.c.bf16 %v2690, %v2689
      %v2713 = vpack.c.bf16 %v2692, %v2691
      %v2714 = vpack.c.bf16 %v2694, %v2693
      %v2715 = vpack.c.bf16 %v2696, %v2695
      %v2716 = vpack.c.bf16 %v2698, %v2697
      %v2717 = vpack.c.bf16 %v2700, %v2699
      %v2718 = vpack.c.bf16 %v2702, %v2701
      %2719 = vst [vmem:[#allocation3 + $0x10] sm:$0xff] %v2703
      %2720 = vst [vmem:[#allocation3 + $0x28] sm:$0xff] %v2704
      %2721 = vst [vmem:[#allocation3 + $0x40] sm:$0xff] %v2705
      %2722 = vst [vmem:[#allocation3 + $0x58] sm:$0xff] %v2706
      %2723 = vst [vmem:[#allocation3 + $0x70] sm:$0xff] %v2707
      %2724 = vst [vmem:[#allocation3 + $0x88] sm:$0xff] %v2708
      %2725 = vst [vmem:[#allocation3 + $0xa0] sm:$0xff] %v2709
      %2726 = vst [vmem:[#allocation3 + $0xb8] sm:$0xff] %v2710
      %2727 = vst [vmem:[#allocation3 + $0xd0] sm:$0xff] %v2711
      %2728 = vst [vmem:[#allocation3 + $0xe8] sm:$0xff] %v2712
      %2729 = vst [vmem:[#allocation3 + $0x100] sm:$0xff] %v2713
      %2730 = vst [vmem:[#allocation3 + $0x118] sm:$0xff] %v2714
      %2731 = vst [vmem:[#allocation3 + $0x130] sm:$0xff] %v2715
      %2732 = vst [vmem:[#allocation3 + $0x148] sm:$0xff] %v2716
      %2733 = vst [vmem:[#allocation3 + $0x160] sm:$0xff] %v2717
      %2734 = vst [vmem:[#allocation3 + $0x178] sm:$0xff] %v2718
      %v2735 = vld [vmem:[#allocation3] sm:$0xff]
      %v2736 = vld [vmem:[#allocation3 + $0x8] sm:$0xff]
      %v2737 = vld [vmem:[#allocation3 + $0x10] sm:$0xff]
      %v2738 = vld [vmem:[#allocation3 + $0x18] sm:$0xff]
      %v2739 = vld [vmem:[#allocation3 + $0x20] sm:$0xff]
      %v2740 = vld [vmem:[#allocation3 + $0x28] sm:$0xff]
      %v2741 = vld [vmem:[#allocation3 + $0x30] sm:$0xff]
      %v2742 = vld [vmem:[#allocation3 + $0x38] sm:$0xff]
      %v2743 = vld [vmem:[#allocation3 + $0x40] sm:$0xff]
      %v2744 = vld [vmem:[#allocation3 + $0x48] sm:$0xff]
      %v2745 = vld [vmem:[#allocation3 + $0x50] sm:$0xff]
      %v2746 = vld [vmem:[#allocation3 + $0x58] sm:$0xff]
      %v2747 = vld [vmem:[#allocation3 + $0x60] sm:$0xff]
      %v2748 = vld [vmem:[#allocation3 + $0x68] sm:$0xff]
      %v2749 = vld [vmem:[#allocation3 + $0x70] sm:$0xff]
      %v2750 = vld [vmem:[#allocation3 + $0x78] sm:$0xff]
      %v2751 = vld [vmem:[#allocation3 + $0x80] sm:$0xff]
      %v2752 = vld [vmem:[#allocation3 + $0x88] sm:$0xff]
      %v2753 = vld [vmem:[#allocation3 + $0x90] sm:$0xff]
      %v2754 = vld [vmem:[#allocation3 + $0x98] sm:$0xff]
      %v2755 = vld [vmem:[#allocation3 + $0xa0] sm:$0xff]
      %v2756 = vld [vmem:[#allocation3 + $0xa8] sm:$0xff]
      %v2757 = vld [vmem:[#allocation3 + $0xb0] sm:$0xff]
      %v2758 = vld [vmem:[#allocation3 + $0xb8] sm:$0xff]
      %v2759 = vld [vmem:[#allocation3 + $0xc0] sm:$0xff]
      %v2760 = vld [vmem:[#allocation3 + $0xc8] sm:$0xff]
      %v2761 = vld [vmem:[#allocation3 + $0xd0] sm:$0xff]
      %v2762 = vld [vmem:[#allocation3 + $0xd8] sm:$0xff]
      %v2763 = vld [vmem:[#allocation3 + $0xe0] sm:$0xff]
      %v2764 = vld [vmem:[#allocation3 + $0xe8] sm:$0xff]
      %v2765 = vld [vmem:[#allocation3 + $0xf0] sm:$0xff]
      %v2766 = vld [vmem:[#allocation3 + $0xf8] sm:$0xff]
      %v2767 = vld [vmem:[#allocation3 + $0x100] sm:$0xff]
      %v2768 = vld [vmem:[#allocation3 + $0x108] sm:$0xff]
      %v2769 = vld [vmem:[#allocation3 + $0x110] sm:$0xff]
      %v2770 = vld [vmem:[#allocation3 + $0x118] sm:$0xff]
      %v2771 = vld [vmem:[#allocation3 + $0x120] sm:$0xff]
      %v2772 = vld [vmem:[#allocation3 + $0x128] sm:$0xff]
      %v2773 = vld [vmem:[#allocation3 + $0x130] sm:$0xff]
      %v2774 = vld [vmem:[#allocation3 + $0x138] sm:$0xff]
      %v2775 = vld [vmem:[#allocation3 + $0x140] sm:$0xff]
      %v2776 = vld [vmem:[#allocation3 + $0x148] sm:$0xff]
      %v2777 = vld [vmem:[#allocation3 + $0x150] sm:$0xff]
      %v2778 = vld [vmem:[#allocation3 + $0x158] sm:$0xff]
      %v2779 = vld [vmem:[#allocation3 + $0x160] sm:$0xff]
      %v2780 = vld [vmem:[#allocation3 + $0x168] sm:$0xff]
      %v2781 = vld [vmem:[#allocation3 + $0x170] sm:$0xff]
      %v2782 = vld [vmem:[#allocation3 + $0x178] sm:$0xff]
      %v2783 = vld [vmem:[%s5] sm:$0xf]
      %v2784 = vld [vmem:[%s5 + $0x4] sm:$0xf]
      %v2785 = vld [vmem:[%s5 + $0x8] sm:$0xf]
      %v2786 = vld [vmem:[%s5 + $0xc] sm:$0xf]
      %v2787 = vld [vmem:[%s5 + $0x10] sm:$0xf]
      %v2788 = vld [vmem:[%s5 + $0x14] sm:$0xf]
      %v2789 = vld [vmem:[%s5 + $0x18] sm:$0xf]
      %v2790 = vld [vmem:[%s5 + $0x1c] sm:$0xf]
      %v2791 = vld [vmem:[%s5 + $0x20] sm:$0xf]
      %v2792 = vld [vmem:[%s5 + $0x24] sm:$0xf]
      %v2793 = vld [vmem:[%s5 + $0x28] sm:$0xf]
      %v2794 = vld [vmem:[%s5 + $0x2c] sm:$0xf]
      %v2795 = vld [vmem:[%s5 + $0x30] sm:$0xf]
      %v2796 = vld [vmem:[%s5 + $0x34] sm:$0xf]
      %v2797 = vld [vmem:[%s5 + $0x38] sm:$0xf]
      %v2798 = vld [vmem:[%s5 + $0x3c] sm:$0xf]
      %v2799 = vld [vmem:[%s5 + $0x40] sm:$0xf]
      %v2800 = vld [vmem:[%s5 + $0x44] sm:$0xf]
      %v2801 = vld [vmem:[%s5 + $0x48] sm:$0xf]
      %v2802 = vld [vmem:[%s5 + $0x4c] sm:$0xf]
      %v2803 = vld [vmem:[%s5 + $0x50] sm:$0xf]
      %v2804 = vld [vmem:[%s5 + $0x54] sm:$0xf]
      %v2805 = vld [vmem:[%s5 + $0x58] sm:$0xf]
      %v2806 = vld [vmem:[%s5 + $0x5c] sm:$0xf]
      %v2807 = vld [vmem:[%s5 + $0x60] sm:$0xf]
      %v2808 = vld [vmem:[%s5 + $0x64] sm:$0xf]
      %v2809 = vld [vmem:[%s5 + $0x68] sm:$0xf]
      %v2810 = vld [vmem:[%s5 + $0x6c] sm:$0xf]
      %v2811 = vld [vmem:[%s5 + $0x70] sm:$0xf]
      %v2812 = vld [vmem:[%s5 + $0x74] sm:$0xf]
      %v2813 = vld [vmem:[%s5 + $0x78] sm:$0xf]
      %v2814 = vld [vmem:[%s5 + $0x7c] sm:$0xf]
      %v2815 = vld [vmem:[%s5 + $0x80] sm:$0xf]
      %v2816 = vld [vmem:[%s5 + $0x84] sm:$0xf]
      %v2817 = vld [vmem:[%s5 + $0x88] sm:$0xf]
      %v2818 = vld [vmem:[%s5 + $0x8c] sm:$0xf]
      %v2819 = vld [vmem:[%s5 + $0x90] sm:$0xf]
      %v2820 = vld [vmem:[%s5 + $0x94] sm:$0xf]
      %v2821 = vld [vmem:[%s5 + $0x98] sm:$0xf]
      %v2822 = vld [vmem:[%s5 + $0x9c] sm:$0xf]
      %v2823 = vld [vmem:[%s5 + $0xa0] sm:$0xf]
      %v2824 = vld [vmem:[%s5 + $0xa4] sm:$0xf]
      %v2825 = vld [vmem:[%s5 + $0xa8] sm:$0xf]
      %v2826 = vld [vmem:[%s5 + $0xac] sm:$0xf]
      %v2827 = vld [vmem:[%s5 + $0xb0] sm:$0xf]
      %v2828 = vld [vmem:[%s5 + $0xb4] sm:$0xf]
      %v2829 = vld [vmem:[%s5 + $0xb8] sm:$0xf]
      %v2830 = vld [vmem:[%s5 + $0xbc] sm:$0xf]
      %v2879 = vunpack.c.l.b16 %v2783
      %v2880 = vunpack.c.l.b16 %v2784
      %v2881 = vunpack.c.l.b16 %v2785
      %v2882 = vunpack.c.l.b16 %v2786
      %v2883 = vunpack.c.l.b16 %v2787
      %v2884 = vunpack.c.l.b16 %v2788
      %v2885 = vunpack.c.l.b16 %v2789
      %v2886 = vunpack.c.l.b16 %v2790
      %v2887 = vunpack.c.l.b16 %v2791
      %v2888 = vunpack.c.l.b16 %v2792
      %v2889 = vunpack.c.l.b16 %v2793
      %v2890 = vunpack.c.l.b16 %v2794
      %v2891 = vunpack.c.l.b16 %v2795
      %v2892 = vunpack.c.l.b16 %v2796
      %v2893 = vunpack.c.l.b16 %v2797
      %v2894 = vunpack.c.l.b16 %v2798
      %v2895 = vunpack.c.l.b16 %v2799
      %v2896 = vunpack.c.l.b16 %v2800
      %v2897 = vunpack.c.l.b16 %v2801
      %v2898 = vunpack.c.l.b16 %v2802
      %v2899 = vunpack.c.l.b16 %v2803
      %v2900 = vunpack.c.l.b16 %v2804
      %v2901 = vunpack.c.l.b16 %v2805
      %v2902 = vunpack.c.l.b16 %v2806
      %v2903 = vunpack.c.l.b16 %v2807
      %v2904 = vunpack.c.l.b16 %v2808
      %v2905 = vunpack.c.l.b16 %v2809
      %v2906 = vunpack.c.l.b16 %v2810
      %v2907 = vunpack.c.l.b16 %v2811
      %v2908 = vunpack.c.l.b16 %v2812
      %v2909 = vunpack.c.l.b16 %v2813
      %v2910 = vunpack.c.l.b16 %v2814
      %v2911 = vunpack.c.l.b16 %v2815
      %v2912 = vunpack.c.l.b16 %v2816
      %v2913 = vunpack.c.l.b16 %v2817
      %v2914 = vunpack.c.l.b16 %v2818
      %v2915 = vunpack.c.l.b16 %v2819
      %v2916 = vunpack.c.l.b16 %v2820
      %v2917 = vunpack.c.l.b16 %v2821
      %v2918 = vunpack.c.l.b16 %v2822
      %v2919 = vunpack.c.l.b16 %v2823
      %v2920 = vunpack.c.l.b16 %v2824
      %v2921 = vunpack.c.l.b16 %v2825
      %v2922 = vunpack.c.l.b16 %v2826
      %v2923 = vunpack.c.l.b16 %v2827
      %v2924 = vunpack.c.l.b16 %v2828
      %v2925 = vunpack.c.l.b16 %v2829
      %v2926 = vunpack.c.l.b16 %v2830
      %v2927 = vpack.c.b16 %v2880, %v2879
      %v2928 = vpack.c.b16 %v2882, %v2881
      %v2929 = vpack.c.b16 %v2884, %v2883
      %v2930 = vpack.c.b16 %v2886, %v2885
      %v2931 = vpack.c.b16 %v2888, %v2887
      %v2932 = vpack.c.b16 %v2890, %v2889
      %v2933 = vpack.c.b16 %v2892, %v2891
      %v2934 = vpack.c.b16 %v2894, %v2893
      %v2935 = vpack.c.b16 %v2896, %v2895
      %v2936 = vpack.c.b16 %v2898, %v2897
      %v2937 = vpack.c.b16 %v2900, %v2899
      %v2938 = vpack.c.b16 %v2902, %v2901
      %v2939 = vpack.c.b16 %v2904, %v2903
      %v2940 = vpack.c.b16 %v2906, %v2905
      %v2941 = vpack.c.b16 %v2908, %v2907
      %v2942 = vpack.c.b16 %v2910, %v2909
      %v2943 = vpack.c.b16 %v2912, %v2911
      %v2944 = vpack.c.b16 %v2914, %v2913
      %v2945 = vpack.c.b16 %v2916, %v2915
      %v2946 = vpack.c.b16 %v2918, %v2917
      %v2947 = vpack.c.b16 %v2920, %v2919
      %v2948 = vpack.c.b16 %v2922, %v2921
      %v2949 = vpack.c.b16 %v2924, %v2923
      %v2950 = vpack.c.b16 %v2926, %v2925
      %2975 = vmatprep.subr.bf16.mxu0 0
      %2976 = vmatpush1.bf16.msra.mxu0 %v2927
      %2977 = vmatprep.subr.bf16.mxu0 0
      %2978 = vmatpush1.bf16.msra.mxu0 %v2928
      %2979 = vmatprep.subr.bf16.mxu0 0
      %2980 = vmatpush1.bf16.msra.mxu0 %v2929
      %2981 = vmatprep.subr.bf16.mxu0 0
      %2982 = vmatpush1.bf16.msra.mxu0 %v2930
      %2983 = vmatprep.subr.bf16.mxu0 0
      %2984 = vmatpush1.bf16.msra.mxu0 %v2931
      %2985 = vmatprep.subr.bf16.mxu0 0
      %2986 = vmatpush1.bf16.msra.mxu0 %v2932
      %2987 = vmatprep.subr.bf16.mxu0 0
      %2988 = vmatpush1.bf16.msra.mxu0 %v2933
      %2989 = vmatprep.subr.bf16.mxu0 0
      %2990 = vmatpush1.bf16.msra.mxu0 %v2934
      %2991 = vmatprep.subr.bf16.mxu0 0
      %2992 = vmatpush1.bf16.msra.mxu0 %v2935
      %2993 = vmatprep.subr.bf16.mxu0 0
      %2994 = vmatpush1.bf16.msra.mxu0 %v2936
      %2995 = vmatprep.subr.bf16.mxu0 0
      %2996 = vmatpush1.bf16.msra.mxu0 %v2937
      %2997 = vmatprep.subr.bf16.mxu0 0
      %2998 = vmatpush1.bf16.msra.mxu0 %v2938
      %2999 = vmatprep.subr.bf16.mxu0 0
      %3000 = vmatpush1.bf16.msra.mxu0 %v2939
      %3001 = vmatprep.subr.bf16.mxu0 0
      %3002 = vmatpush1.bf16.msra.mxu0 %v2940
      %3003 = vmatprep.subr.bf16.mxu0 0
      %3004 = vmatpush1.bf16.msra.mxu0 %v2941
      %3005 = vmatprep.subr.bf16.mxu0 0
      %3006 = vmatpush1.bf16.msra.mxu0 %v2942
      %3007 = vmatprep.mubr.bf16.mxu0 %v2736
      %3008 = vmatmul.mubr.bf16.gmra.mrb[0].mxu0 %v2735
      %v3009 = vpop.f32.mrb[0].mxu0
      %v3010 = vadd.f32 0.0, %v3009
      %v3011 = vpop.f32.mrb[0].mxu0
      %v3012 = vpop.f32.mrb[0].mxu0
      %v3013 = vadd.f32 0.0, %v3012
      %v3014 = vpop.f32.mrb[0].mxu0
      %3015 = vmatprep.mubr.bf16.mxu0 %v2739
      %3016 = vmatmul.mubr.bf16.gmra.mrb[0].mxu0 %v2738
      %v3017 = vpop.f32.mrb[0].mxu0
      %v3018 = vadd.f32 0.0, %v3017
      %v3019 = vpop.f32.mrb[0].mxu0
      %v3020 = vpop.f32.mrb[0].mxu0
      %v3021 = vadd.f32 0.0, %v3020
      %v3022 = vpop.f32.mrb[0].mxu0
      %3023 = vmatprep.mubr.bf16.mxu0 %v2742
      %3024 = vmatmul.mubr.bf16.gmra.mrb[0].mxu0 %v2741
      %v3025 = vpop.f32.mrb[0].mxu0
      %v3026 = vadd.f32 0.0, %v3025
      %v3027 = vpop.f32.mrb[0].mxu0
      %v3028 = vpop.f32.mrb[0].mxu0
      %v3029 = vadd.f32 0.0, %v3028
      %v3030 = vpop.f32.mrb[0].mxu0
      %3031 = vmatprep.mubr.bf16.mxu0 %v2745
      %3032 = vmatmul.mubr.bf16.gmra.mrb[0].mxu0 %v2744
      %v3033 = vpop.f32.mrb[0].mxu0
      %v3034 = vadd.f32 0.0, %v3033
      %v3035 = vpop.f32.mrb[0].mxu0
      %v3036 = vpop.f32.mrb[0].mxu0
      %v3037 = vadd.f32 0.0, %v3036
      %v3038 = vpop.f32.mrb[0].mxu0
      %3039 = vmatprep.mubr.bf16.mxu0 %v2748
      %3040 = vmatmul.mubr.bf16.gmra.mrb[0].mxu0 %v2747
      %v3041 = vpop.f32.mrb[0].mxu0
      %v3042 = vadd.f32 0.0, %v3041
      %v3043 = vpop.f32.mrb[0].mxu0
      %v3044 = vpop.f32.mrb[0].mxu0
      %v3045 = vadd.f32 0.0, %v3044
      %v3046 = vpop.f32.mrb[0].mxu0
      %3047 = vmatprep.mubr.bf16.mxu0 %v2751
      %3048 = vmatmul.mubr.bf16.gmra.mrb[0].mxu0 %v2750
      %v3049 = vpop.f32.mrb[0].mxu0
      %v3050 = vadd.f32 0.0, %v3049
      %v3051 = vpop.f32.mrb[0].mxu0
      %v3052 = vpop.f32.mrb[0].mxu0
      %v3053 = vadd.f32 0.0, %v3052
      %v3054 = vpop.f32.mrb[0].mxu0
      %3055 = vmatprep.mubr.bf16.mxu0 %v2754
      %3056 = vmatmul.mubr.bf16.gmra.mrb[0].mxu0 %v2753
      %v3057 = vpop.f32.mrb[0].mxu0
      %v3058 = vadd.f32 0.0, %v3057
      %v3059 = vpop.f32.mrb[0].mxu0
      %v3060 = vpop.f32.mrb[0].mxu0
      %v3061 = vadd.f32 0.0, %v3060
      %v3062 = vpop.f32.mrb[0].mxu0
      %3063 = vmatprep.mubr.bf16.mxu0 %v2757
      %3064 = vmatmul.mubr.bf16.gmra.mrb[0].mxu0 %v2756
      %v3065 = vpop.f32.mrb[0].mxu0
      %v3066 = vadd.f32 0.0, %v3065
      %v3067 = vpop.f32.mrb[0].mxu0
      %v3068 = vpop.f32.mrb[0].mxu0
      %v3069 = vadd.f32 0.0, %v3068
      %v3070 = vpop.f32.mrb[0].mxu0
      %3071 = vmatprep.mubr.bf16.mxu0 %v2760
      %3072 = vmatmul.mubr.bf16.gmra.mrb[0].mxu0 %v2759
      %v3073 = vpop.f32.mrb[0].mxu0
      %v3074 = vadd.f32 0.0, %v3073
      %v3075 = vpop.f32.mrb[0].mxu0
      %v3076 = vpop.f32.mrb[0].mxu0
      %v3077 = vadd.f32 0.0, %v3076
      %v3078 = vpop.f32.mrb[0].mxu0
      %3079 = vmatprep.mubr.bf16.mxu0 %v2763
      %3080 = vmatmul.mubr.bf16.gmra.mrb[0].mxu0 %v2762
      %v3081 = vpop.f32.mrb[0].mxu0
      %v3082 = vadd.f32 0.0, %v3081
      %v3083 = vpop.f32.mrb[0].mxu0
      %v3084 = vpop.f32.mrb[0].mxu0
      %v3085 = vadd.f32 0.0, %v3084
      %v3086 = vpop.f32.mrb[0].mxu0
      %3087 = vmatprep.mubr.bf16.mxu0 %v2766
      %3088 = vmatmul.mubr.bf16.gmra.mrb[0].mxu0 %v2765
      %v3089 = vpop.f32.mrb[0].mxu0
      %v3090 = vadd.f32 0.0, %v3089
      %v3091 = vpop.f32.mrb[0].mxu0
      %v3092 = vpop.f32.mrb[0].mxu0
      %v3093 = vadd.f32 0.0, %v3092
      %v3094 = vpop.f32.mrb[0].mxu0
      %3095 = vmatprep.mubr.bf16.mxu0 %v2769
      %3096 = vmatmul.mubr.bf16.gmra.mrb[0].mxu0 %v2768
      %v3097 = vpop.f32.mrb[0].mxu0
      %v3098 = vadd.f32 0.0, %v3097
      %v3099 = vpop.f32.mrb[0].mxu0
      %v3100 = vpop.f32.mrb[0].mxu0
      %v3101 = vadd.f32 0.0, %v3100
      %v3102 = vpop.f32.mrb[0].mxu0
      %3103 = vmatprep.mubr.bf16.mxu0 %v2772
      %3104 = vmatmul.mubr.bf16.gmra.mrb[0].mxu0 %v2771
      %v3105 = vpop.f32.mrb[0].mxu0
      %v3106 = vadd.f32 0.0, %v3105
      %v3107 = vpop.f32.mrb[0].mxu0
      %v3108 = vpop.f32.mrb[0].mxu0
      %v3109 = vadd.f32 0.0, %v3108
      %v3110 = vpop.f32.mrb[0].mxu0
      %3111 = vmatprep.mubr.bf16.mxu0 %v2775
      %3112 = vmatmul.mubr.bf16.gmra.mrb[0].mxu0 %v2774
      %v3113 = vpop.f32.mrb[0].mxu0
      %v3114 = vadd.f32 0.0, %v3113
      %v3115 = vpop.f32.mrb[0].mxu0
      %v3116 = vpop.f32.mrb[0].mxu0
      %v3117 = vadd.f32 0.0, %v3116
      %v3118 = vpop.f32.mrb[0].mxu0
      %3119 = vmatprep.mubr.bf16.mxu0 %v2778
      %3120 = vmatmul.mubr.bf16.gmra.mrb[0].mxu0 %v2777
      %v3121 = vpop.f32.mrb[0].mxu0
      %v3122 = vadd.f32 0.0, %v3121
      %v3123 = vpop.f32.mrb[0].mxu0
      %v3124 = vpop.f32.mrb[0].mxu0
      %v3125 = vadd.f32 0.0, %v3124
      %v3126 = vpop.f32.mrb[0].mxu0
      %3127 = vmatprep.mubr.bf16.mxu0 %v2781
      %3128 = vmatmul.mubr.bf16.gmra.mrb[0].mxu0 %v2780
      %v3129 = vpop.f32.mrb[0].mxu0
      %v3130 = vadd.f32 0.0, %v3129
      %v3131 = vpop.f32.mrb[0].mxu0
      %v3132 = vpop.f32.mrb[0].mxu0
      %v3133 = vadd.f32 0.0, %v3132
      %v3134 = vpop.f32.mrb[0].mxu0
      %3135 = vdwg.mxu0
      %3136 = vmatprep.subr.bf16.mxu0 0
      %3137 = vmatpush1.bf16.msra.mxu0 %v2943
      %3138 = vmatprep.subr.bf16.mxu0 0
      %3139 = vmatpush1.bf16.msra.mxu0 %v2944
      %3140 = vmatprep.subr.bf16.mxu0 0
      %3141 = vmatpush1.bf16.msra.mxu0 %v2945
      %3142 = vmatprep.subr.bf16.mxu0 0
      %3143 = vmatpush1.bf16.msra.mxu0 %v2946
      %3144 = vmatprep.subr.bf16.mxu0 0
      %3145 = vmatpush1.bf16.msra.mxu0 %v2947
      %3146 = vmatprep.subr.bf16.mxu0 0
      %3147 = vmatpush1.bf16.msra.mxu0 %v2948
      %3148 = vmatprep.subr.bf16.mxu0 0
      %3149 = vmatpush1.bf16.msra.mxu0 %v2949
      %3150 = vmatprep.subr.bf16.mxu0 0
      %3151 = vmatpush1.bf16.msra.mxu0 %v2950
      %3152 = vmatprep.subr.bf16.mxu0 0
      %3153 = vmatpush1.bf16.msra.mxu0 0
      %3154 = vmatprep.subr.bf16.mxu0 0
      %3155 = vmatpush1.bf16.msra.mxu0 0
      %3156 = vmatprep.subr.bf16.mxu0 0
      %3157 = vmatpush1.bf16.msra.mxu0 0
      %3158 = vmatprep.subr.bf16.mxu0 0
      %3159 = vmatpush1.bf16.msra.mxu0 0
      %3160 = vmatprep.subr.bf16.mxu0 0
      %3161 = vmatpush1.bf16.msra.mxu0 0
      %3162 = vmatprep.subr.bf16.mxu0 0
      %3163 = vmatpush1.bf16.msra.mxu0 0
      %3164 = vmatprep.subr.bf16.mxu0 0
      %3165 = vmatpush1.bf16.msra.mxu0 0
      %3166 = vmatprep.subr.bf16.mxu0 0
      %3167 = vmatpush1.bf16.msra.mxu0 0
      %3168 = vmatprep.mubr.bf16.mxu0 0
      %3169 = vmatmul.mubr.bf16.gmra.mrb[0].mxu0 %v2737
      %v3170 = vpop.f32.mrb[0].mxu0
      %v3171 = vadd.f32 %v3010, %v3170
      %v3172 = vpop.f32.mrb[0].mxu0
      %v3173 = vpop.f32.mrb[0].mxu0
      %v3174 = vadd.f32 %v3013, %v3173
      %v3175 = vpop.f32.mrb[0].mxu0
      %3176 = vmatprep.mubr.bf16.mxu0 0
      %3177 = vmatmul.mubr.bf16.gmra.mrb[0].mxu0 %v2740
      %v3178 = vpop.f32.mrb[0].mxu0
      %v3179 = vadd.f32 %v3018, %v3178
      %v3180 = vpop.f32.mrb[0].mxu0
      %v3181 = vpop.f32.mrb[0].mxu0
      %v3182 = vadd.f32 %v3021, %v3181
      %v3183 = vpop.f32.mrb[0].mxu0
      %3184 = vmatprep.mubr.bf16.mxu0 0
      %3185 = vmatmul.mubr.bf16.gmra.mrb[0].mxu0 %v2743
      %v3186 = vpop.f32.mrb[0].mxu0
      %v3187 = vadd.f32 %v3026, %v3186
      %v3188 = vpop.f32.mrb[0].mxu0
      %v3189 = vpop.f32.mrb[0].mxu0
      %v3190 = vadd.f32 %v3029, %v3189
      %v3191 = vpop.f32.mrb[0].mxu0
      %3192 = vmatprep.mubr.bf16.mxu0 0
      %3193 = vmatmul.mubr.bf16.gmra.mrb[0].mxu0 %v2746
      %v3194 = vpop.f32.mrb[0].mxu0
      %v3195 = vadd.f32 %v3034, %v3194
      %v3196 = vpop.f32.mrb[0].mxu0
      %v3197 = vpop.f32.mrb[0].mxu0
      %v3198 = vadd.f32 %v3037, %v3197
      %v3199 = vpop.f32.mrb[0].mxu0
      %3200 = vmatprep.mubr.bf16.mxu0 0
      %3201 = vmatmul.mubr.bf16.gmra.mrb[0].mxu0 %v2749
      %v3202 = vpop.f32.mrb[0].mxu0
      %v3203 = vadd.f32 %v3042, %v3202
      %v3204 = vpop.f32.mrb[0].mxu0
      %v3205 = vpop.f32.mrb[0].mxu0
      %v3206 = vadd.f32 %v3045, %v3205
      %v3207 = vpop.f32.mrb[0].mxu0
      %3208 = vmatprep.mubr.bf16.mxu0 0
      %3209 = vmatmul.mubr.bf16.gmra.mrb[0].mxu0 %v2752
      %v3210 = vpop.f32.mrb[0].mxu0
      %v3211 = vadd.f32 %v3050, %v3210
      %v3212 = vpop.f32.mrb[0].mxu0
      %v3213 = vpop.f32.mrb[0].mxu0
      %v3214 = vadd.f32 %v3053, %v3213
      %v3215 = vpop.f32.mrb[0].mxu0
      %3216 = vmatprep.mubr.bf16.mxu0 0
      %3217 = vmatmul.mubr.bf16.gmra.mrb[0].mxu0 %v2755
      %v3218 = vpop.f32.mrb[0].mxu0
      %v3219 = vadd.f32 %v3058, %v3218
      %v3220 = vpop.f32.mrb[0].mxu0
      %v3221 = vpop.f32.mrb[0].mxu0
      %v3222 = vadd.f32 %v3061, %v3221
      %v3223 = vpop.f32.mrb[0].mxu0
      %3224 = vmatprep.mubr.bf16.mxu0 0
      %3225 = vmatmul.mubr.bf16.gmra.mrb[0].mxu0 %v2758
      %v3226 = vpop.f32.mrb[0].mxu0
      %v3227 = vadd.f32 %v3066, %v3226
      %v3228 = vpop.f32.mrb[0].mxu0
      %v3229 = vpop.f32.mrb[0].mxu0
      %v3230 = vadd.f32 %v3069, %v3229
      %v3231 = vpop.f32.mrb[0].mxu0
      %3232 = vmatprep.mubr.bf16.mxu0 0
      %3233 = vmatmul.mubr.bf16.gmra.mrb[0].mxu0 %v2761
      %v3234 = vpop.f32.mrb[0].mxu0
      %v3235 = vadd.f32 %v3074, %v3234
      %v3236 = vpop.f32.mrb[0].mxu0
      %v3237 = vpop.f32.mrb[0].mxu0
      %v3238 = vadd.f32 %v3077, %v3237
      %v3239 = vpop.f32.mrb[0].mxu0
      %3240 = vmatprep.mubr.bf16.mxu0 0
      %3241 = vmatmul.mubr.bf16.gmra.mrb[0].mxu0 %v2764
      %v3242 = vpop.f32.mrb[0].mxu0
      %v3243 = vadd.f32 %v3082, %v3242
      %v3244 = vpop.f32.mrb[0].mxu0
      %v3245 = vpop.f32.mrb[0].mxu0
      %v3246 = vadd.f32 %v3085, %v3245
      %v3247 = vpop.f32.mrb[0].mxu0
      %3248 = vmatprep.mubr.bf16.mxu0 0
      %3249 = vmatmul.mubr.bf16.gmra.mrb[0].mxu0 %v2767
      %v3250 = vpop.f32.mrb[0].mxu0
      %v3251 = vadd.f32 %v3090, %v3250
      %v3252 = vpop.f32.mrb[0].mxu0
      %v3253 = vpop.f32.mrb[0].mxu0
      %v3254 = vadd.f32 %v3093, %v3253
      %v3255 = vpop.f32.mrb[0].mxu0
      %3256 = vmatprep.mubr.bf16.mxu0 0
      %3257 = vmatmul.mubr.bf16.gmra.mrb[0].mxu0 %v2770
      %v3258 = vpop.f32.mrb[0].mxu0
      %v3259 = vadd.f32 %v3098, %v3258
      %v3260 = vpop.f32.mrb[0].mxu0
      %v3261 = vpop.f32.mrb[0].mxu0
      %v3262 = vadd.f32 %v3101, %v3261
      %v3263 = vpop.f32.mrb[0].mxu0
      %3264 = vmatprep.mubr.bf16.mxu0 0
      %3265 = vmatmul.mubr.bf16.gmra.mrb[0].mxu0 %v2773
      %v3266 = vpop.f32.mrb[0].mxu0
      %v3267 = vadd.f32 %v3106, %v3266
      %v3268 = vpop.f32.mrb[0].mxu0
      %v3269 = vpop.f32.mrb[0].mxu0
      %v3270 = vadd.f32 %v3109, %v3269
      %v3271 = vpop.f32.mrb[0].mxu0
      %3272 = vmatprep.mubr.bf16.mxu0 0
      %3273 = vmatmul.mubr.bf16.gmra.mrb[0].mxu0 %v2776
      %v3274 = vpop.f32.mrb[0].mxu0
      %v3275 = vadd.f32 %v3114, %v3274
      %v3276 = vpop.f32.mrb[0].mxu0
      %v3277 = vpop.f32.mrb[0].mxu0
      %v3278 = vadd.f32 %v3117, %v3277
      %v3279 = vpop.f32.mrb[0].mxu0
      %3280 = vmatprep.mubr.bf16.mxu0 0
      %3281 = vmatmul.mubr.bf16.gmra.mrb[0].mxu0 %v2779
      %v3282 = vpop.f32.mrb[0].mxu0
      %v3283 = vadd.f32 %v3122, %v3282
      %v3284 = vpop.f32.mrb[0].mxu0
      %v3285 = vpop.f32.mrb[0].mxu0
      %v3286 = vadd.f32 %v3125, %v3285
      %v3287 = vpop.f32.mrb[0].mxu0
      %3288 = vmatprep.mubr.bf16.mxu0 0
      %3289 = vmatmul.mubr.bf16.gmra.mrb[0].mxu0 %v2782
      %v3290 = vpop.f32.mrb[0].mxu0
      %v3291 = vadd.f32 %v3130, %v3290
      %v3292 = vpop.f32.mrb[0].mxu0
      %v3293 = vpop.f32.mrb[0].mxu0
      %v3294 = vadd.f32 %v3133, %v3293
      %v3295 = vpop.f32.mrb[0].mxu0
      %3296 = vdwg.mxu0
      %v3297 = vpack.c.bf16 %v3174, %v3171
      %v3298 = vpack.c.bf16 %v3182, %v3179
      %v3299 = vpack.c.bf16 %v3190, %v3187
      %v3300 = vpack.c.bf16 %v3198, %v3195
      %v3301 = vpack.c.bf16 %v3206, %v3203
      %v3302 = vpack.c.bf16 %v3214, %v3211
      %v3303 = vpack.c.bf16 %v3222, %v3219
      %v3304 = vpack.c.bf16 %v3230, %v3227
      %v3305 = vpack.c.bf16 %v3238, %v3235
      %v3306 = vpack.c.bf16 %v3246, %v3243
      %v3307 = vpack.c.bf16 %v3254, %v3251
      %v3308 = vpack.c.bf16 %v3262, %v3259
      %v3309 = vpack.c.bf16 %v3270, %v3267
      %v3310 = vpack.c.bf16 %v3278, %v3275
      %v3311 = vpack.c.bf16 %v3286, %v3283
      %v3312 = vpack.c.bf16 %v3294, %v3291
      %v3329 = vunpack.c.l.b16 %v3297
      %v3330 = vunpack.c.h.b16 %v3297
      %v3331 = vunpack.c.l.b16 %v3298
      %v3332 = vunpack.c.h.b16 %v3298
      %v3333 = vunpack.c.l.b16 %v3299
      %v3334 = vunpack.c.h.b16 %v3299
      %v3335 = vunpack.c.l.b16 %v3300
      %v3336 = vunpack.c.h.b16 %v3300
      %v3337 = vunpack.c.l.b16 %v3301
      %v3338 = vunpack.c.h.b16 %v3301
      %v3339 = vunpack.c.l.b16 %v3302
      %v3340 = vunpack.c.h.b16 %v3302
      %v3341 = vunpack.c.l.b16 %v3303
      %v3342 = vunpack.c.h.b16 %v3303
      %v3343 = vunpack.c.l.b16 %v3304
      %v3344 = vunpack.c.h.b16 %v3304
      %v3345 = vunpack.c.l.b16 %v3305
      %v3346 = vunpack.c.h.b16 %v3305
      %v3347 = vunpack.c.l.b16 %v3306
      %v3348 = vunpack.c.h.b16 %v3306
      %v3349 = vunpack.c.l.b16 %v3307
      %v3350 = vunpack.c.h.b16 %v3307
      %v3351 = vunpack.c.l.b16 %v3308
      %v3352 = vunpack.c.h.b16 %v3308
      %v3353 = vunpack.c.l.b16 %v3309
      %v3354 = vunpack.c.h.b16 %v3309
      %v3355 = vunpack.c.l.b16 %v3310
      %v3356 = vunpack.c.h.b16 %v3310
      %v3357 = vunpack.c.l.b16 %v3311
      %v3358 = vunpack.c.h.b16 %v3311
      %v3359 = vunpack.c.l.b16 %v3312
      %v3360 = vunpack.c.h.b16 %v3312
      %v3361 = vpack.c.b16 %v3329, %v3329
      %v3362 = vpack.c.b16 %v3330, %v3330
      %v3363 = vpack.c.b16 %v3331, %v3331
      %v3364 = vpack.c.b16 %v3332, %v3332
      %v3365 = vpack.c.b16 %v3333, %v3333
      %v3366 = vpack.c.b16 %v3334, %v3334
      %v3367 = vpack.c.b16 %v3335, %v3335
      %v3368 = vpack.c.b16 %v3336, %v3336
      %v3369 = vpack.c.b16 %v3337, %v3337
      %v3370 = vpack.c.b16 %v3338, %v3338
      %v3371 = vpack.c.b16 %v3339, %v3339
      %v3372 = vpack.c.b16 %v3340, %v3340
      %v3373 = vpack.c.b16 %v3341, %v3341
      %v3374 = vpack.c.b16 %v3342, %v3342
      %v3375 = vpack.c.b16 %v3343, %v3343
      %v3376 = vpack.c.b16 %v3344, %v3344
      %v3377 = vpack.c.b16 %v3345, %v3345
      %v3378 = vpack.c.b16 %v3346, %v3346
      %v3379 = vpack.c.b16 %v3347, %v3347
      %v3380 = vpack.c.b16 %v3348, %v3348
      %v3381 = vpack.c.b16 %v3349, %v3349
      %v3382 = vpack.c.b16 %v3350, %v3350
      %v3383 = vpack.c.b16 %v3351, %v3351
      %v3384 = vpack.c.b16 %v3352, %v3352
      %v3385 = vpack.c.b16 %v3353, %v3353
      %v3386 = vpack.c.b16 %v3354, %v3354
      %v3387 = vpack.c.b16 %v3355, %v3355
      %v3388 = vpack.c.b16 %v3356, %v3356
      %v3389 = vpack.c.b16 %v3357, %v3357
      %v3390 = vpack.c.b16 %v3358, %v3358
      %v3391 = vpack.c.b16 %v3359, %v3359
      %v3392 = vpack.c.b16 %v3360, %v3360
      %3425 = vst [vmem:[%s253] sm:$0xf] %v3361
      %3426 = vst [vmem:[%s253 + $0x4] sm:$0xf] %v3362
      %3427 = vst [vmem:[%s253 + $0x8] sm:$0xf] %v3363
      %3428 = vst [vmem:[%s253 + $0xc] sm:$0xf] %v3364
      %3429 = vst [vmem:[%s253 + $0x10] sm:$0xf] %v3365
      %3430 = vst [vmem:[%s253 + $0x14] sm:$0xf] %v3366
      %3431 = vst [vmem:[%s253 + $0x18] sm:$0xf] %v3367
      %3432 = vst [vmem:[%s253 + $0x1c] sm:$0xf] %v3368
      %3433 = vst [vmem:[%s253 + $0x20] sm:$0xf] %v3369
      %3434 = vst [vmem:[%s253 + $0x24] sm:$0xf] %v3370
      %3435 = vst [vmem:[%s253 + $0x28] sm:$0xf] %v3371
      %3436 = vst [vmem:[%s253 + $0x2c] sm:$0xf] %v3372
      %3437 = vst [vmem:[%s253 + $0x30] sm:$0xf] %v3373
      %3438 = vst [vmem:[%s253 + $0x34] sm:$0xf] %v3374
      %3439 = vst [vmem:[%s253 + $0x38] sm:$0xf] %v3375
      %3440 = vst [vmem:[%s253 + $0x3c] sm:$0xf] %v3376
      %3441 = vst [vmem:[%s253 + $0x40] sm:$0xf] %v3377
      %3442 = vst [vmem:[%s253 + $0x44] sm:$0xf] %v3378
      %3443 = vst [vmem:[%s253 + $0x48] sm:$0xf] %v3379
      %3444 = vst [vmem:[%s253 + $0x4c] sm:$0xf] %v3380
      %3445 = vst [vmem:[%s253 + $0x50] sm:$0xf] %v3381
      %3446 = vst [vmem:[%s253 + $0x54] sm:$0xf] %v3382
      %3447 = vst [vmem:[%s253 + $0x58] sm:$0xf] %v3383
      %3448 = vst [vmem:[%s253 + $0x5c] sm:$0xf] %v3384
      %3449 = vst [vmem:[%s253 + $0x60] sm:$0xf] %v3385
      %3450 = vst [vmem:[%s253 + $0x64] sm:$0xf] %v3386
      %3451 = vst [vmem:[%s253 + $0x68] sm:$0xf] %v3387
      %3452 = vst [vmem:[%s253 + $0x6c] sm:$0xf] %v3388
      %3453 = vst [vmem:[%s253 + $0x70] sm:$0xf] %v3389
      %3454 = vst [vmem:[%s253 + $0x74] sm:$0xf] %v3390
      %3455 = vst [vmem:[%s253 + $0x78] sm:$0xf] %v3391
      %3456 = vst [vmem:[%s253 + $0x7c] sm:$0xf] %v3392
      %s3457 = smul.u32 32, %s17
      %p3458 = scmp.lt.s32.totalorder %s3457, 63
      %s3459 = scalar_select %p3458, %s3457, 63
      %s3460 = smul.addr %s3459, 4
      %s3461 = scalar_lea.vmem %s6, %s3460
      // Predicated region
      $region45: #{osa_forward_nhwc.1} parent=43 // pred_check
        %p3462 = pneg %p166
      $region46: #{osa_forward_nhwc.1} parent=43 // pred_check_branch
        %3464 = sbr.rel (%p3462) target = $region48
      $region47: #{osa_forward_nhwc.1} parent=43 // pred_region
        %s3465 = smul.u32 32, %s17
      $region48: #{osa_forward_nhwc.1} parent=43 // pred_fallthru
        _
    $region44: #{osa_forward_nhwc.1} parent=5 // pred_fallthru
      _
    %p3466 = scmp.le.s32.totalorder 2, %s12
    // Predicated region
    $region49: #{osa_forward_nhwc.1} parent=5 // pred_check
      %p3467 = pneg %p3466
    $region50: #{osa_forward_nhwc.1} parent=5 // pred_check_branch
      %3469 = sbr.rel (%p3467) target = $region52
    $region51: #{osa_forward_nhwc.1} parent=5 // pred_region
      %s3470 = ssub.s32 %s12, 2
      // Predicated region
      $region53: #{osa_forward_nhwc.1} parent=51 // pred_check
        %p3471 = pneg %p172
      $region54: #{osa_forward_nhwc.1} parent=51 // pred_check_branch
        %3473 = sbr.rel (%p3471) target = $region56
      $region55: #{osa_forward_nhwc.1} parent=51 // pred_region
        %s3474 = smul.u32 32, %s18
        %p3475 = scmp.lt.s32.totalorder %s3474, 63
        %s3476 = scalar_select %p3475, %s3474, 63
        %s3477 = smul.addr %s3476, 4
        %s3478 = scalar_lea.vmem %s6, %s3477
      $region56: #{osa_forward_nhwc.1} parent=51 // pred_fallthru
        _
    $region52: #{osa_forward_nhwc.1} parent=5 // pred_fallthru
      _
  $region6: #{osa_forward_nhwc.1} parent=0 // loop_footer
    %s16 = sadd.s32 1, %s12
  $region7: #{osa_forward_nhwc.1} parent=0 // loop_footer_branch
    %11 = sbr.rel target = $region3
  $region8: #{osa_forward_nhwc.1} parent=0 // loop_exit
    _

</llo_original>
